<compile_context>
chip_gen: v6e
topology: v6e:2x2x1
jax: 0.10.0
libtpu: 0.0.40
codegen_flags: <defaults>
</compile_context>

<pallas_src>
import functools

import jax
import jax.numpy as jnp
from jax.experimental import pallas as pl
from jax.experimental.pallas import tpu as pltpu

EPSILON = float(jnp.finfo(jnp.float32).eps)  # matches torch.finfo(torch.float32).eps
_HIGHEST = jax.lax.Precision.HIGHEST


def _supernet_kernel(n_layers, comp,
                     scal_ref, h_ref, x_ref, w1t_ref, w2t_ref, out_ref):
    """Single-invocation kernel; whole problem resident in VMEM.

    scal_ref : SMEM (2,)      -> [l1 + EPS, l2]
    h_ref    : VMEM (B, C)       initial factor estimate
    x_ref    : VMEM (B, F)       data
    w1t_ref  : VMEM (L, C, C)    w1t[l] == W1[l].T
    w2t_ref  : VMEM (F, L*C)     columns [l*C:(l+1)*C] == W2[l].T
    out_ref  : VMEM (B, C)
    """
    l1_eps = scal_ref[0]          # l1 + EPSILON, folded in the wrapper
    l2 = scal_ref[1]

    h = h_ref[...].astype(jnp.float32)          # (B, C)
    x = x_ref[...].astype(jnp.float32)          # (B, F)

    # Hoisted numerators: one MXU matmul for all layers (independent of h).
    # (B, F) @ (F, L*C) -> (B, L*C);  slice l gives x @ W2[l].T.
    numer_all = jnp.dot(x, w2t_ref[...].astype(jnp.float32),
                        preferred_element_type=jnp.float32,
                        precision=_HIGHEST)

    # Serial multiplicative updates, statically unrolled (n_layers is small).
    for l in range(n_layers):
        w1t = w1t_ref[l].astype(jnp.float32)              # (C, C) == W1[l].T
        numer = numer_all[:, l * comp:(l + 1) * comp]     # (B, C)
        denom = (jnp.dot(h, w1t, preferred_element_type=jnp.float32,
                         precision=_HIGHEST)
                 + l2 * h + l1_eps)
        h = (numer / denom) * h

    out_ref[...] = h.astype(out_ref.dtype)


def supernet_forward(h, x, w1_stack, w2_stack, l1, l2):
    B, comp = h.shape
    _, features = x.shape
    n_layers = w1_stack.shape[0]

    # Pre-transpose weights once in the wrapper so the kernel feeds the MXU
    # directly (no in-kernel XLU transposes):
    #   w1t[l]           = W1[l].T                      -> (L, C, C)
    #   w2t[:, l*C:(l+1)*C] = W2[l].T                   -> (F, L*C)
    w1t = jnp.transpose(w1_stack, (0, 2, 1))
    w2t = jnp.transpose(w2_stack, (2, 0, 1)).reshape(features, n_layers * comp)

    # Fold l1 + EPSILON into a single scalar; ship [l1+eps, l2] via SMEM.
    scalars = jnp.concatenate([l1 + EPSILON, l2]).astype(jnp.float32)   # (2,)

    kernel = functools.partial(_supernet_kernel, n_layers, comp)

    return pl.pallas_call(
        kernel,
        out_shape=jax.ShapeDtypeStruct((B, comp), h.dtype),
        in_specs=[
            pl.BlockSpec(memory_space=pltpu.MemorySpace.SMEM),   # [l1+eps, l2]
            pl.BlockSpec(memory_space=pltpu.MemorySpace.VMEM),   # h
            pl.BlockSpec(memory_space=pltpu.MemorySpace.VMEM),   # x
            pl.BlockSpec(memory_space=pltpu.MemorySpace.VMEM),   # w1t
            pl.BlockSpec(memory_space=pltpu.MemorySpace.VMEM),   # w2t
        ],
        out_specs=pl.BlockSpec(memory_space=pltpu.MemorySpace.VMEM),
    )(scalars, h, x, w1t, w2t)


def supernet_reference(h, x, w1_stack, w2_stack, l1, l2):
    """Pure-JAX reference mirroring the PyTorch forward (full-f32 matmuls)."""
    h = h.astype(jnp.float32)
    x = x.astype(jnp.float32)
    for i in range(w1_stack.shape[0]):
        denom = (jnp.dot(h, w1_stack[i].T, precision=_HIGHEST)
                 + l2[0] * h + l1[0] + EPSILON)
        numer = jnp.dot(x, w2_stack[i].T, precision=_HIGHEST)
        h = (numer / denom) * h
    return h


if __name__ == "__main__":
    # Small shapes implied by the module: h:(batch, comp), x:(batch, features).
    n_layers, batch, comp, features = 3, 8, 16, 32

    key = jax.random.PRNGKey(0)
    k_h, k_x, k_w1, k_w2, k_l1, k_l2 = jax.random.split(key, 6)

    # Non-negative NMF-style inputs/weights -> strictly positive, well-scaled
    # denominators (the multiplicative-update formulation assumes this).
    h0 = jax.random.uniform(k_h, (batch, comp), jnp.float32, minval=0.1, maxval=1.0)
    x = jax.random.uniform(k_x, (batch, features), jnp.float32, minval=0.1, maxval=1.0)
    w1_stack = jax.random.uniform(k_w1, (n_layers, comp, comp), jnp.float32,
                                  minval=0.0, maxval=0.5)
    w2_stack = jax.random.uniform(k_w2, (n_layers, comp, features), jnp.float32,
                                  minval=0.0, maxval=0.5)
    l1 = jax.random.uniform(k_l1, (1,), jnp.float32)   # shared across layers
    l2 = jax.random.uniform(k_l2, (1,), jnp.float32)   # shared across layers

    out = supernet_forward(h0, x, w1_stack, w2_stack, l1, l2)
    out = jax.block_until_ready(out)

    ref = supernet_reference(h0, x, w1_stack, w2_stack, l1, l2)
    assert out.shape == (batch, comp)
    assert jnp.allclose(out, ref, rtol=1e-4, atol=1e-4), "mismatch vs reference"

    print("KERNEL_OK")
</pallas_src>

<mosaic_0001>
module attributes {stable_mosaic.version = 11 : i64} {
  func.func @_supernet_kernel(%arg0: memref<2xf32, #tpu.memory_space<smem>>, %arg1: memref<8x16xf32, #tpu.memory_space<vmem>>, %arg2: memref<8x32xf32, #tpu.memory_space<vmem>>, %arg3: memref<3x16x16xf32, #tpu.memory_space<vmem>>, %arg4: memref<32x48xf32, #tpu.memory_space<vmem>>, %arg5: memref<8x16xf32, #tpu.memory_space<vmem>>) attributes {dimension_semantics = [], scalar_prefetch = 0 : i64, scratch_operands = 0 : i64, tpu.core_type = #tpu.core_type<tc>} {
    %c0 = arith.constant 0 : index
    %0 = memref.load %arg0[%c0] : memref<2xf32, #tpu.memory_space<smem>>
    %c1 = arith.constant 1 : index
    %1 = memref.load %arg0[%c1] : memref<2xf32, #tpu.memory_space<smem>>
    %c0_0 = arith.constant 0 : index
    %c0_1 = arith.constant 0 : index
    %2 = vector.load %arg1[%c0_0, %c0_1] : memref<8x16xf32, #tpu.memory_space<vmem>>, vector<8x16xf32>
    %c0_2 = arith.constant 0 : index
    %c0_3 = arith.constant 0 : index
    %3 = vector.load %arg2[%c0_2, %c0_3] : memref<8x32xf32, #tpu.memory_space<vmem>>, vector<8x32xf32>
    %c0_4 = arith.constant 0 : index
    %c0_5 = arith.constant 0 : index
    %4 = vector.load %arg4[%c0_4, %c0_5] : memref<32x48xf32, #tpu.memory_space<vmem>>, vector<32x48xf32>
    %cst = arith.constant dense<0.000000e+00> : vector<8x48xf32>
    %5 = tpu.matmul %3, %4, %cst {dimension_numbers = #tpu.dot_dimension_numbers<[1], [0], [0], [1], [0, 0, 1, 1], [], []>, precision = #tpu.contract_precision<fp32>} : vector<8x32xf32>, vector<32x48xf32>, vector<8x48xf32> -> vector<8x48xf32>
    %c0_6 = arith.constant 0 : index
    %c0_7 = arith.constant 0 : index
    %c0_8 = arith.constant 0 : index
    %6 = vector.load %arg3[%c0_6, %c0_7, %c0_8] : memref<3x16x16xf32, #tpu.memory_space<vmem>>, vector<1x16x16xf32>
    %7 = vector.shape_cast %6 : vector<1x16x16xf32> to vector<16x16xf32>
    %8 = vector.extract_strided_slice %5 {offsets = [0, 0], sizes = [8, 16], strides = [1, 1]} : vector<8x48xf32> to vector<8x16xf32>
    %cst_9 = arith.constant dense<0.000000e+00> : vector<8x16xf32>
    %9 = tpu.matmul %2, %7, %cst_9 {dimension_numbers = #tpu.dot_dimension_numbers<[1], [0], [0], [1], [0, 0, 1, 1], [], []>, precision = #tpu.contract_precision<fp32>} : vector<8x16xf32>, vector<16x16xf32>, vector<8x16xf32> -> vector<8x16xf32>
    %10 = vector.broadcast %1 : f32 to vector<8x16xf32>
    %11 = arith.mulf %10, %2 : vector<8x16xf32>
    %12 = arith.addf %9, %11 : vector<8x16xf32>
    %13 = vector.broadcast %0 : f32 to vector<8x16xf32>
    %14 = arith.addf %12, %13 : vector<8x16xf32>
    %15 = arith.divf %8, %14 : vector<8x16xf32>
    %16 = arith.mulf %15, %2 : vector<8x16xf32>
    %c1_10 = arith.constant 1 : index
    %c0_11 = arith.constant 0 : index
    %c0_12 = arith.constant 0 : index
    %17 = vector.load %arg3[%c1_10, %c0_11, %c0_12] : memref<3x16x16xf32, #tpu.memory_space<vmem>>, vector<1x16x16xf32>
    %18 = vector.shape_cast %17 : vector<1x16x16xf32> to vector<16x16xf32>
    %19 = vector.extract_strided_slice %5 {offsets = [0, 16], sizes = [8, 16], strides = [1, 1]} : vector<8x48xf32> to vector<8x16xf32>
    %cst_13 = arith.constant dense<0.000000e+00> : vector<8x16xf32>
    %20 = tpu.matmul %16, %18, %cst_13 {dimension_numbers = #tpu.dot_dimension_numbers<[1], [0], [0], [1], [0, 0, 1, 1], [], []>, precision = #tpu.contract_precision<fp32>} : vector<8x16xf32>, vector<16x16xf32>, vector<8x16xf32> -> vector<8x16xf32>
    %21 = vector.broadcast %1 : f32 to vector<8x16xf32>
    %22 = arith.mulf %21, %16 : vector<8x16xf32>
    %23 = arith.addf %20, %22 : vector<8x16xf32>
    %24 = vector.broadcast %0 : f32 to vector<8x16xf32>
    %25 = arith.addf %23, %24 : vector<8x16xf32>
    %26 = arith.divf %19, %25 : vector<8x16xf32>
    %27 = arith.mulf %26, %16 : vector<8x16xf32>
    %c2 = arith.constant 2 : index
    %c0_14 = arith.constant 0 : index
    %c0_15 = arith.constant 0 : index
    %28 = vector.load %arg3[%c2, %c0_14, %c0_15] : memref<3x16x16xf32, #tpu.memory_space<vmem>>, vector<1x16x16xf32>
    %29 = vector.shape_cast %28 : vector<1x16x16xf32> to vector<16x16xf32>
    %30 = vector.extract_strided_slice %5 {offsets = [0, 32], sizes = [8, 16], strides = [1, 1]} : vector<8x48xf32> to vector<8x16xf32>
    %cst_16 = arith.constant dense<0.000000e+00> : vector<8x16xf32>
    %31 = tpu.matmul %27, %29, %cst_16 {dimension_numbers = #tpu.dot_dimension_numbers<[1], [0], [0], [1], [0, 0, 1, 1], [], []>, precision = #tpu.contract_precision<fp32>} : vector<8x16xf32>, vector<16x16xf32>, vector<8x16xf32> -> vector<8x16xf32>
    %32 = vector.broadcast %1 : f32 to vector<8x16xf32>
    %33 = arith.mulf %32, %27 : vector<8x16xf32>
    %34 = arith.addf %31, %33 : vector<8x16xf32>
    %35 = vector.broadcast %0 : f32 to vector<8x16xf32>
    %36 = arith.addf %34, %35 : vector<8x16xf32>
    %37 = arith.divf %30, %36 : vector<8x16xf32>
    %38 = arith.mulf %37, %27 : vector<8x16xf32>
    %c0_17 = arith.constant 0 : index
    %c0_18 = arith.constant 0 : index
    %39 = vector.load %arg5[%c0_17, %c0_18] : memref<8x16xf32, #tpu.memory_space<vmem>>, vector<8x16xf32>
    tpu.vector_store %arg5[%c0_17, %c0_18], %38 {strides = array<i32>} : memref<8x16xf32, #tpu.memory_space<vmem>>, vector<8x16xf32>,
    return
  }
}

</mosaic_0001>

<llo_original>
// kernel: tpu_custom_call.1
$region0: #{tpu_custom_call.1}
  #allocation0 [shape = 'u32[]', space=smem, size = 0x4, offset = 0x4, fixed_abs, tag = 'smem constant byte address 0x4 - core index']
  #allocation1 [shape = 'u32[144,128]{1,0:T(1,128)}', space=vmem, size = 0x12000, scoped, tag = 'internal scratch']
  %s0 = inlined_call_operand.hbm [shape: f32[2], index: 0, kind: input, shape index: {}]
  %s1 = inlined_call_operand.hbm [shape: f32[8,16], index: 1, kind: input, shape index: {}]
  %s2 = inlined_call_operand.hbm [shape: f32[8,32], index: 2, kind: input, shape index: {}]
  %s3 = inlined_call_operand.hbm [shape: f32[3,16,16], index: 3, kind: input, shape index: {}]
  %s4 = inlined_call_operand.hbm [shape: f32[32,48], index: 4, kind: input, shape index: {}]
  %s5 = inlined_call_operand.hbm [shape: f32[8,16], index: 5, kind: output, shape index: {}]
  %s6 = sld [smem:[#allocation0]]
  $region50: #{tpu_custom_call.1} parent=0
    _
  %s8 = ssub.s32 1, %s6
  %s9 = scalar_select 0, %s8, %s6
  $region1: #{tpu_custom_call.1} parent=0
    #allocation2 [shape = 'u8[512]{0}', space=smem, size = 0x200, scoped, tag = 'input window, operand 0, single buffered']
    #allocation3 [shape = 's32[1]{0}', space=sflag, size = 0x4, scoped, tag = 'scoped memory for tpu_custom_call.1']
    #allocation4 [shape = 's32[1]{0}', space=sflag, size = 0x4, scoped, tag = 'scoped memory for tpu_custom_call.1']
    #allocation5 [shape = 's32[1]{0}', space=sflag, size = 0x4, scoped, tag = 'scoped memory for tpu_custom_call.1']
    #allocation6 [shape = 'u8[4096]{0}', space=vmem, size = 0x1000, scoped, tag = 'input window, operand 1, single buffered']
    #allocation7 [shape = 'u8[4096]{0}', space=vmem, size = 0x1000, scoped, tag = 'input window, operand 2, single buffered']
    #allocation8 [shape = 's32[1]{0}', space=sflag, size = 0x4, scoped, tag = 'scoped memory for tpu_custom_call.1']
    #allocation9 [shape = 'u8[24576]{0}', space=vmem, size = 0x6000, scoped, tag = 'input window, operand 3, single buffered']
    #allocation10 [shape = 'u8[16384]{0}', space=vmem, size = 0x4000, scoped, tag = 'input window, operand 4, single buffered']
    #allocation11 [shape = 's32[1]{0}', space=sflag, size = 0x4, scoped, tag = 'scoped memory for tpu_custom_call.1']
    #allocation12 [shape = 'u8[4096]{0}', space=vmem, size = 0x1000, scoped, tag = 'output window, operand 0, single buffered']
    %10 = vsyncpa [#allocation5], 0
    %11 = vsyncpa [#allocation3], 0
    %12 = vsyncpa [#allocation8], 0
    %13 = vsyncpa [#allocation11], 0
    %14 = vsyncpa [#allocation4], 0
    // Predicated region
    $region2: #{tpu_custom_call.1} parent=1 // pred_check
      _
    $region3: #{tpu_custom_call.1} parent=1 // pred_check_branch
      %16 = sbr.rel (0) target = $region5
    $region4: #{tpu_custom_call.1} parent=1 // pred_region
      %s18 = ssub.s32 16, 16
      %19 = vsyncadd [#allocation5], %s18
      %22 = dma.hbm_to_smem %s0, 16, [#allocation2], [#allocation5]
    $region5: #{tpu_custom_call.1} parent=1 // pred_fallthru
      _
    // Predicated region
    $region6: #{tpu_custom_call.1} parent=1 // pred_check
      _
    $region7: #{tpu_custom_call.1} parent=1 // pred_check_branch
      %24 = sbr.rel (0) target = $region9
    $region8: #{tpu_custom_call.1} parent=1 // pred_region
      %s26 = ssub.s32 128, 128
      %27 = vsyncadd [#allocation3], %s26
      %s29 = sshll.u32 [#allocation6], 4
      %s30 = int_to_ptr.vmem [resolvable:$true] %s29
      %32 = dma.hbm_to_vmem [thread:$0]  %s1, 128, %s30, [#allocation3]
    $region9: #{tpu_custom_call.1} parent=1 // pred_fallthru
      _
    // Predicated region
    $region10: #{tpu_custom_call.1} parent=1 // pred_check
      _
    $region11: #{tpu_custom_call.1} parent=1 // pred_check_branch
      %34 = sbr.rel (0) target = $region13
    $region12: #{tpu_custom_call.1} parent=1 // pred_region
      %s36 = ssub.s32 128, 128
      %37 = vsyncadd [#allocation8], %s36
      %s39 = sshll.u32 [#allocation7], 4
      %s40 = int_to_ptr.vmem [resolvable:$true] %s39
      %42 = dma.hbm_to_vmem [thread:$0]  %s2, 128, %s40, [#allocation8]
    $region13: #{tpu_custom_call.1} parent=1 // pred_fallthru
      _
    // Predicated region
    $region14: #{tpu_custom_call.1} parent=1 // pred_check
      _
    $region15: #{tpu_custom_call.1} parent=1 // pred_check_branch
      %44 = sbr.rel (0) target = $region17
    $region16: #{tpu_custom_call.1} parent=1 // pred_region
      %s46 = ssub.s32 768, 768
      %47 = vsyncadd [#allocation8], %s46
      %s48 = sshll.u32 [#allocation9], 4
      %s49 = int_to_ptr.vmem [resolvable:$true] %s48
      %54 = dma.hbm_to_vmem [thread:$0]  %s3, 768, %s49, [#allocation8], 128, 128, 8
    $region17: #{tpu_custom_call.1} parent=1 // pred_fallthru
      _
    // Predicated region
    $region18: #{tpu_custom_call.1} parent=1 // pred_check
      _
    $region19: #{tpu_custom_call.1} parent=1 // pred_check_branch
      %56 = sbr.rel (0) target = $region21
    $region20: #{tpu_custom_call.1} parent=1 // pred_region
      %s58 = ssub.s32 512, 512
      %59 = vsyncadd [#allocation11], %s58
      %s60 = sshll.u32 [#allocation10], 4
      %s61 = int_to_ptr.vmem [resolvable:$true] %s60
      %66 = dma.hbm_to_vmem [thread:$0]  %s4, 512, %s61, [#allocation11], 128, 128, 8
    $region21: #{tpu_custom_call.1} parent=1 // pred_fallthru
      _
    // Predicated region
    $region22: #{tpu_custom_call.1} parent=1 // pred_check
      _
    $region23: #{tpu_custom_call.1} parent=1 // pred_check_branch
      %68 = sbr.rel (0) target = $region25
    $region24: #{tpu_custom_call.1} parent=1 // pred_region
      %69 = dma.done [#allocation5], 16
    $region25: #{tpu_custom_call.1} parent=1 // pred_fallthru
      _
    // Predicated region
    $region26: #{tpu_custom_call.1} parent=1 // pred_check
      _
    $region27: #{tpu_custom_call.1} parent=1 // pred_check_branch
      %71 = sbr.rel (0) target = $region29
    $region28: #{tpu_custom_call.1} parent=1 // pred_region
      %72 = dma.done [#allocation3], 128
    $region29: #{tpu_custom_call.1} parent=1 // pred_fallthru
      _
    // Predicated region
    $region30: #{tpu_custom_call.1} parent=1 // pred_check
      _
    $region31: #{tpu_custom_call.1} parent=1 // pred_check_branch
      %74 = sbr.rel (0) target = $region33
    $region32: #{tpu_custom_call.1} parent=1 // pred_region
      %75 = dma.done [#allocation8], 128
    $region33: #{tpu_custom_call.1} parent=1 // pred_fallthru
      _
    // Predicated region
    $region34: #{tpu_custom_call.1} parent=1 // pred_check
      _
    $region35: #{tpu_custom_call.1} parent=1 // pred_check_branch
      %77 = sbr.rel (0) target = $region37
    $region36: #{tpu_custom_call.1} parent=1 // pred_region
      %78 = dma.done [#allocation8], 768
    $region37: #{tpu_custom_call.1} parent=1 // pred_fallthru
      _
    // Predicated region
    $region38: #{tpu_custom_call.1} parent=1 // pred_check
      _
    $region39: #{tpu_custom_call.1} parent=1 // pred_check_branch
      %80 = sbr.rel (0) target = $region41
    $region40: #{tpu_custom_call.1} parent=1 // pred_region
      %81 = dma.done [#allocation11], 512
    $region41: #{tpu_custom_call.1} parent=1 // pred_fallthru
      _
    %82 = sfence
    %s83 = sld [smem:[#allocation2]]
    %s84 = sld [smem:[#allocation2 + $0x1]]
    %v85 = vld [vmem:[#allocation6] sm:$0xff]
    %v86 = vld [vmem:[#allocation7] sm:$0xff]
    %v87 = vld [vmem:[#allocation10] sm:$0xff]
    %v88 = vld [vmem:[#allocation10 + $0x8] sm:$0xff]
    %v89 = vld [vmem:[#allocation10 + $0x10] sm:$0xff]
    %v90 = vld [vmem:[#allocation10 + $0x18] sm:$0xff]
    %vm91 = vcmask 261120
    %v93 = vsel %vm91, %v86, 0
    %95 = vmatprep.subr.mxu0 0.0
    %96 = vmatpush1.msra.mxu0 0.0
    %97 = vmatprep.subr.mxu0 0.0
    %98 = vmatpush1.msra.mxu0 0.0
    %99 = vmatprep.subr.mxu0 0.0
    %100 = vmatpush1.msra.mxu0 0.0
    %101 = vmatprep.subr.mxu0 0.0
    %102 = vmatpush1.msra.mxu0 0.0
    %103 = vmatprep.subr.mxu0 0.0
    %104 = vmatpush1.msra.mxu0 0.0
    %105 = vmatprep.subr.mxu0 0.0
    %106 = vmatpush1.msra.mxu0 0.0
    %107 = vmatprep.subr.mxu0 0.0
    %108 = vmatpush1.msra.mxu0 0.0
    %109 = vmatprep.subr.mxu0 0.0
    %110 = vmatpush1.msra.mxu0 0.0
    %111 = vmatprep.subr.mxu0 0.0
    %112 = vmatpush1.msra.mxu0 0.0
    %113 = vmatprep.subr.mxu0 0.0
    %114 = vmatpush1.msra.mxu0 0.0
    %115 = vmatprep.subr.mxu0 0.0
    %116 = vmatpush1.msra.mxu0 0.0
    %117 = vmatprep.subr.mxu0 0.0
    %118 = vmatpush1.msra.mxu0 0.0
    %119 = vmatprep.subr.mxu0 0.0
    %v120 = vand.u32 %v90, 4294901760
    %121 = vmatpush1.msra.mxu0 %v120
    %122 = vmatprep.subr.mxu0 0.0
    %v123 = vand.u32 %v89, 4294901760
    %124 = vmatpush1.msra.mxu0 %v123
    %125 = vmatprep.subr.mxu0 0.0
    %v126 = vand.u32 %v88, 4294901760
    %127 = vmatpush1.msra.mxu0 %v126
    %128 = vmatprep.subr.mxu0 0.0
    %v129 = vand.u32 %v87, 4294901760
    %130 = vmatpush1.msra.mxu0 %v129
    %131 = vmatprep.subr.mxu0 0.0
    %132 = vmatpush2.msra.mxu0 0.0
    %133 = vmatprep.subr.mxu0 0.0
    %134 = vmatpush2.msra.mxu0 0.0
    %135 = vmatprep.subr.mxu0 0.0
    %136 = vmatpush2.msra.mxu0 0.0
    %137 = vmatprep.subr.mxu0 0.0
    %138 = vmatpush2.msra.mxu0 0.0
    %139 = vmatprep.subr.mxu0 0.0
    %140 = vmatpush2.msra.mxu0 0.0
    %141 = vmatprep.subr.mxu0 0.0
    %142 = vmatpush2.msra.mxu0 0.0
    %143 = vmatprep.subr.mxu0 0.0
    %144 = vmatpush2.msra.mxu0 0.0
    %145 = vmatprep.subr.mxu0 0.0
    %146 = vmatpush2.msra.mxu0 0.0
    %147 = vmatprep.subr.mxu0 0.0
    %148 = vmatpush2.msra.mxu0 0.0
    %149 = vmatprep.subr.mxu0 0.0
    %150 = vmatpush2.msra.mxu0 0.0
    %151 = vmatprep.subr.mxu0 0.0
    %152 = vmatpush2.msra.mxu0 0.0
    %153 = vmatprep.subr.mxu0 0.0
    %154 = vmatpush2.msra.mxu0 0.0
    %155 = vmatprep.subr.mxu0 0.0
    %156 = vmatpush2.msra.mxu0 0.0
    %157 = vmatprep.subr.mxu0 0.0
    %158 = vmatpush2.msra.mxu0 0.0
    %159 = vmatprep.subr.mxu0 0.0
    %160 = vmatpush2.msra.mxu0 0.0
    %161 = vmatprep.subr.mxu0 0.0
    %162 = vmatpush2.msra.mxu0 0.0
    %163 = vmatprep.mubr.f32.mxu0 0.0
    %v164 = vand.u32 %v93, 4294901760
    %v165 = vsub.f32 %v93, %v164
    %v166 = vand.u32 %v165, 4294901760
    %v167 = vsub.f32 %v165, %v166
    %v168 = vand.u32 %v167, 4294901760
    %169 = vmatmul.mubr.f32.gmra.mxu0 %v168
    %v170 = vpop.f32.mrf.mxu0
    %v171 = vadd.f32 0.0, %v170
    %v172 = vpop.f32.mrf.mxu0
    %173 = vdwg.mxu0
    %174 = vmatprep.subr.mxu0 0.0
    %175 = vmatpush1.msra.mxu0 0.0
    %176 = vmatprep.subr.mxu0 0.0
    %177 = vmatpush1.msra.mxu0 0.0
    %178 = vmatprep.subr.mxu0 0.0
    %179 = vmatpush1.msra.mxu0 0.0
    %180 = vmatprep.subr.mxu0 0.0
    %181 = vmatpush1.msra.mxu0 0.0
    %182 = vmatprep.subr.mxu0 0.0
    %183 = vmatpush1.msra.mxu0 0.0
    %184 = vmatprep.subr.mxu0 0.0
    %185 = vmatpush1.msra.mxu0 0.0
    %186 = vmatprep.subr.mxu0 0.0
    %187 = vmatpush1.msra.mxu0 0.0
    %188 = vmatprep.subr.mxu0 0.0
    %189 = vmatpush1.msra.mxu0 0.0
    %190 = vmatprep.subr.mxu0 0.0
    %191 = vmatpush1.msra.mxu0 0.0
    %192 = vmatprep.subr.mxu0 0.0
    %193 = vmatpush1.msra.mxu0 0.0
    %194 = vmatprep.subr.mxu0 0.0
    %195 = vmatpush1.msra.mxu0 0.0
    %196 = vmatprep.subr.mxu0 0.0
    %197 = vmatpush1.msra.mxu0 0.0
    %198 = vmatprep.subr.mxu0 0.0
    %v199 = vand.u32 %v90, 4294901760
    %v200 = vsub.f32 %v90, %v199
    %v201 = vand.u32 %v200, 4294901760
    %v202 = vsub.f32 %v200, %v201
    %v203 = vand.u32 %v202, 4294901760
    %204 = vmatpush1.msra.mxu0 %v203
    %205 = vmatprep.subr.mxu0 0.0
    %v206 = vand.u32 %v89, 4294901760
    %v207 = vsub.f32 %v89, %v206
    %v208 = vand.u32 %v207, 4294901760
    %v209 = vsub.f32 %v207, %v208
    %v210 = vand.u32 %v209, 4294901760
    %211 = vmatpush1.msra.mxu0 %v210
    %212 = vmatprep.subr.mxu0 0.0
    %v213 = vand.u32 %v88, 4294901760
    %v214 = vsub.f32 %v88, %v213
    %v215 = vand.u32 %v214, 4294901760
    %v216 = vsub.f32 %v214, %v215
    %v217 = vand.u32 %v216, 4294901760
    %218 = vmatpush1.msra.mxu0 %v217
    %219 = vmatprep.subr.mxu0 0.0
    %v220 = vand.u32 %v87, 4294901760
    %v221 = vsub.f32 %v87, %v220
    %v222 = vand.u32 %v221, 4294901760
    %v223 = vsub.f32 %v221, %v222
    %v224 = vand.u32 %v223, 4294901760
    %225 = vmatpush1.msra.mxu0 %v224
    %226 = vmatprep.subr.mxu0 0.0
    %227 = vmatpush2.msra.mxu0 0.0
    %228 = vmatprep.subr.mxu0 0.0
    %229 = vmatpush2.msra.mxu0 0.0
    %230 = vmatprep.subr.mxu0 0.0
    %231 = vmatpush2.msra.mxu0 0.0
    %232 = vmatprep.subr.mxu0 0.0
    %233 = vmatpush2.msra.mxu0 0.0
    %234 = vmatprep.subr.mxu0 0.0
    %235 = vmatpush2.msra.mxu0 0.0
    %236 = vmatprep.subr.mxu0 0.0
    %237 = vmatpush2.msra.mxu0 0.0
    %238 = vmatprep.subr.mxu0 0.0
    %239 = vmatpush2.msra.mxu0 0.0
    %240 = vmatprep.subr.mxu0 0.0
    %241 = vmatpush2.msra.mxu0 0.0
    %242 = vmatprep.subr.mxu0 0.0
    %243 = vmatpush2.msra.mxu0 0.0
    %244 = vmatprep.subr.mxu0 0.0
    %245 = vmatpush2.msra.mxu0 0.0
    %246 = vmatprep.subr.mxu0 0.0
    %247 = vmatpush2.msra.mxu0 0.0
    %248 = vmatprep.subr.mxu0 0.0
    %249 = vmatpush2.msra.mxu0 0.0
    %250 = vmatprep.subr.mxu0 0.0
    %251 = vmatpush2.msra.mxu0 0.0
    %252 = vmatprep.subr.mxu0 0.0
    %253 = vmatpush2.msra.mxu0 0.0
    %254 = vmatprep.subr.mxu0 0.0
    %255 = vmatpush2.msra.mxu0 0.0
    %256 = vmatprep.subr.mxu0 0.0
    %257 = vmatpush2.msra.mxu0 0.0
    %258 = vmatprep.mubr.f32.mxu0 0.0
    %v259 = vand.u32 %v93, 4294901760
    %260 = vmatmul.mubr.f32.gmra.mxu0 %v259
    %v261 = vpop.f32.mrf.mxu0
    %v262 = vadd.f32 %v171, %v261
    %v263 = vpop.f32.mrf.mxu0
    %264 = vdwg.mxu0
    %265 = vmatprep.subr.mxu0 0.0
    %266 = vmatpush1.msra.mxu0 0.0
    %267 = vmatprep.subr.mxu0 0.0
    %268 = vmatpush1.msra.mxu0 0.0
    %269 = vmatprep.subr.mxu0 0.0
    %270 = vmatpush1.msra.mxu0 0.0
    %271 = vmatprep.subr.mxu0 0.0
    %272 = vmatpush1.msra.mxu0 0.0
    %273 = vmatprep.subr.mxu0 0.0
    %274 = vmatpush1.msra.mxu0 0.0
    %275 = vmatprep.subr.mxu0 0.0
    %276 = vmatpush1.msra.mxu0 0.0
    %277 = vmatprep.subr.mxu0 0.0
    %278 = vmatpush1.msra.mxu0 0.0
    %279 = vmatprep.subr.mxu0 0.0
    %280 = vmatpush1.msra.mxu0 0.0
    %281 = vmatprep.subr.mxu0 0.0
    %282 = vmatpush1.msra.mxu0 0.0
    %283 = vmatprep.subr.mxu0 0.0
    %284 = vmatpush1.msra.mxu0 0.0
    %285 = vmatprep.subr.mxu0 0.0
    %286 = vmatpush1.msra.mxu0 0.0
    %287 = vmatprep.subr.mxu0 0.0
    %288 = vmatpush1.msra.mxu0 0.0
    %289 = vmatprep.subr.mxu0 0.0
    %v290 = vand.u32 %v90, 4294901760
    %v291 = vsub.f32 %v90, %v290
    %292 = vmatpush1.msra.mxu0 %v291
    %293 = vmatprep.subr.mxu0 0.0
    %v294 = vand.u32 %v89, 4294901760
    %v295 = vsub.f32 %v89, %v294
    %296 = vmatpush1.msra.mxu0 %v295
    %297 = vmatprep.subr.mxu0 0.0
    %v298 = vand.u32 %v88, 4294901760
    %v299 = vsub.f32 %v88, %v298
    %300 = vmatpush1.msra.mxu0 %v299
    %301 = vmatprep.subr.mxu0 0.0
    %v302 = vand.u32 %v87, 4294901760
    %v303 = vsub.f32 %v87, %v302
    %304 = vmatpush1.msra.mxu0 %v303
    %305 = vmatprep.subr.mxu0 0.0
    %306 = vmatpush2.msra.mxu0 0.0
    %307 = vmatprep.subr.mxu0 0.0
    %308 = vmatpush2.msra.mxu0 0.0
    %309 = vmatprep.subr.mxu0 0.0
    %310 = vmatpush2.msra.mxu0 0.0
    %311 = vmatprep.subr.mxu0 0.0
    %312 = vmatpush2.msra.mxu0 0.0
    %313 = vmatprep.subr.mxu0 0.0
    %314 = vmatpush2.msra.mxu0 0.0
    %315 = vmatprep.subr.mxu0 0.0
    %316 = vmatpush2.msra.mxu0 0.0
    %317 = vmatprep.subr.mxu0 0.0
    %318 = vmatpush2.msra.mxu0 0.0
    %319 = vmatprep.subr.mxu0 0.0
    %320 = vmatpush2.msra.mxu0 0.0
    %321 = vmatprep.subr.mxu0 0.0
    %322 = vmatpush2.msra.mxu0 0.0
    %323 = vmatprep.subr.mxu0 0.0
    %324 = vmatpush2.msra.mxu0 0.0
    %325 = vmatprep.subr.mxu0 0.0
    %326 = vmatpush2.msra.mxu0 0.0
    %327 = vmatprep.subr.mxu0 0.0
    %328 = vmatpush2.msra.mxu0 0.0
    %329 = vmatprep.subr.mxu0 0.0
    %330 = vmatpush2.msra.mxu0 0.0
    %331 = vmatprep.subr.mxu0 0.0
    %332 = vmatpush2.msra.mxu0 0.0
    %333 = vmatprep.subr.mxu0 0.0
    %334 = vmatpush2.msra.mxu0 0.0
    %335 = vmatprep.subr.mxu0 0.0
    %336 = vmatpush2.msra.mxu0 0.0
    %337 = vmatprep.mubr.f32.mxu0 0.0
    %v338 = vand.u32 %v93, 4294901760
    %v339 = vsub.f32 %v93, %v338
    %340 = vmatmul.mubr.f32.gmra.mxu0 %v339
    %v341 = vpop.f32.mrf.mxu0
    %v342 = vadd.f32 %v262, %v341
    %v343 = vpop.f32.mrf.mxu0
    %344 = vdwg.mxu0
    %345 = vmatprep.subr.mxu0 0.0
    %346 = vmatpush1.msra.mxu0 0.0
    %347 = vmatprep.subr.mxu0 0.0
    %348 = vmatpush1.msra.mxu0 0.0
    %349 = vmatprep.subr.mxu0 0.0
    %350 = vmatpush1.msra.mxu0 0.0
    %351 = vmatprep.subr.mxu0 0.0
    %352 = vmatpush1.msra.mxu0 0.0
    %353 = vmatprep.subr.mxu0 0.0
    %354 = vmatpush1.msra.mxu0 0.0
    %355 = vmatprep.subr.mxu0 0.0
    %356 = vmatpush1.msra.mxu0 0.0
    %357 = vmatprep.subr.mxu0 0.0
    %358 = vmatpush1.msra.mxu0 0.0
    %359 = vmatprep.subr.mxu0 0.0
    %360 = vmatpush1.msra.mxu0 0.0
    %361 = vmatprep.subr.mxu0 0.0
    %362 = vmatpush1.msra.mxu0 0.0
    %363 = vmatprep.subr.mxu0 0.0
    %364 = vmatpush1.msra.mxu0 0.0
    %365 = vmatprep.subr.mxu0 0.0
    %366 = vmatpush1.msra.mxu0 0.0
    %367 = vmatprep.subr.mxu0 0.0
    %368 = vmatpush1.msra.mxu0 0.0
    %369 = vmatprep.subr.mxu0 0.0
    %v370 = vand.u32 %v90, 4294901760
    %371 = vmatpush1.msra.mxu0 %v370
    %372 = vmatprep.subr.mxu0 0.0
    %v373 = vand.u32 %v89, 4294901760
    %374 = vmatpush1.msra.mxu0 %v373
    %375 = vmatprep.subr.mxu0 0.0
    %v376 = vand.u32 %v88, 4294901760
    %377 = vmatpush1.msra.mxu0 %v376
    %378 = vmatprep.subr.mxu0 0.0
    %v379 = vand.u32 %v87, 4294901760
    %380 = vmatpush1.msra.mxu0 %v379
    %381 = vmatprep.subr.mxu0 0.0
    %382 = vmatpush2.msra.mxu0 0.0
    %383 = vmatprep.subr.mxu0 0.0
    %384 = vmatpush2.msra.mxu0 0.0
    %385 = vmatprep.subr.mxu0 0.0
    %386 = vmatpush2.msra.mxu0 0.0
    %387 = vmatprep.subr.mxu0 0.0
    %388 = vmatpush2.msra.mxu0 0.0
    %389 = vmatprep.subr.mxu0 0.0
    %390 = vmatpush2.msra.mxu0 0.0
    %391 = vmatprep.subr.mxu0 0.0
    %392 = vmatpush2.msra.mxu0 0.0
    %393 = vmatprep.subr.mxu0 0.0
    %394 = vmatpush2.msra.mxu0 0.0
    %395 = vmatprep.subr.mxu0 0.0
    %396 = vmatpush2.msra.mxu0 0.0
    %397 = vmatprep.subr.mxu0 0.0
    %398 = vmatpush2.msra.mxu0 0.0
    %399 = vmatprep.subr.mxu0 0.0
    %400 = vmatpush2.msra.mxu0 0.0
    %401 = vmatprep.subr.mxu0 0.0
    %402 = vmatpush2.msra.mxu0 0.0
    %403 = vmatprep.subr.mxu0 0.0
    %404 = vmatpush2.msra.mxu0 0.0
    %405 = vmatprep.subr.mxu0 0.0
    %406 = vmatpush2.msra.mxu0 0.0
    %407 = vmatprep.subr.mxu0 0.0
    %408 = vmatpush2.msra.mxu0 0.0
    %409 = vmatprep.subr.mxu0 0.0
    %410 = vmatpush2.msra.mxu0 0.0
    %411 = vmatprep.subr.mxu0 0.0
    %412 = vmatpush2.msra.mxu0 0.0
    %413 = vmatprep.mubr.f32.mxu0 0.0
    %v414 = vand.u32 %v93, 4294901760
    %v415 = vsub.f32 %v93, %v414
    %v416 = vand.u32 %v415, 4294901760
    %417 = vmatmul.mubr.f32.gmra.mxu0 %v416
    %v418 = vpop.f32.mrf.mxu0
    %v419 = vadd.f32 %v342, %v418
    %v420 = vpop.f32.mrf.mxu0
    %421 = vdwg.mxu0
    %422 = vmatprep.subr.mxu0 0.0
    %423 = vmatpush1.msra.mxu0 0.0
    %424 = vmatprep.subr.mxu0 0.0
    %425 = vmatpush1.msra.mxu0 0.0
    %426 = vmatprep.subr.mxu0 0.0
    %427 = vmatpush1.msra.mxu0 0.0
    %428 = vmatprep.subr.mxu0 0.0
    %429 = vmatpush1.msra.mxu0 0.0
    %430 = vmatprep.subr.mxu0 0.0
    %431 = vmatpush1.msra.mxu0 0.0
    %432 = vmatprep.subr.mxu0 0.0
    %433 = vmatpush1.msra.mxu0 0.0
    %434 = vmatprep.subr.mxu0 0.0
    %435 = vmatpush1.msra.mxu0 0.0
    %436 = vmatprep.subr.mxu0 0.0
    %437 = vmatpush1.msra.mxu0 0.0
    %438 = vmatprep.subr.mxu0 0.0
    %439 = vmatpush1.msra.mxu0 0.0
    %440 = vmatprep.subr.mxu0 0.0
    %441 = vmatpush1.msra.mxu0 0.0
    %442 = vmatprep.subr.mxu0 0.0
    %443 = vmatpush1.msra.mxu0 0.0
    %444 = vmatprep.subr.mxu0 0.0
    %445 = vmatpush1.msra.mxu0 0.0
    %446 = vmatprep.subr.mxu0 0.0
    %v447 = vand.u32 %v90, 4294901760
    %v448 = vsub.f32 %v90, %v447
    %v449 = vand.u32 %v448, 4294901760
    %450 = vmatpush1.msra.mxu0 %v449
    %451 = vmatprep.subr.mxu0 0.0
    %v452 = vand.u32 %v89, 4294901760
    %v453 = vsub.f32 %v89, %v452
    %v454 = vand.u32 %v453, 4294901760
    %455 = vmatpush1.msra.mxu0 %v454
    %456 = vmatprep.subr.mxu0 0.0
    %v457 = vand.u32 %v88, 4294901760
    %v458 = vsub.f32 %v88, %v457
    %v459 = vand.u32 %v458, 4294901760
    %460 = vmatpush1.msra.mxu0 %v459
    %461 = vmatprep.subr.mxu0 0.0
    %v462 = vand.u32 %v87, 4294901760
    %v463 = vsub.f32 %v87, %v462
    %v464 = vand.u32 %v463, 4294901760
    %465 = vmatpush1.msra.mxu0 %v464
    %466 = vmatprep.subr.mxu0 0.0
    %467 = vmatpush2.msra.mxu0 0.0
    %468 = vmatprep.subr.mxu0 0.0
    %469 = vmatpush2.msra.mxu0 0.0
    %470 = vmatprep.subr.mxu0 0.0
    %471 = vmatpush2.msra.mxu0 0.0
    %472 = vmatprep.subr.mxu0 0.0
    %473 = vmatpush2.msra.mxu0 0.0
    %474 = vmatprep.subr.mxu0 0.0
    %475 = vmatpush2.msra.mxu0 0.0
    %476 = vmatprep.subr.mxu0 0.0
    %477 = vmatpush2.msra.mxu0 0.0
    %478 = vmatprep.subr.mxu0 0.0
    %479 = vmatpush2.msra.mxu0 0.0
    %480 = vmatprep.subr.mxu0 0.0
    %481 = vmatpush2.msra.mxu0 0.0
    %482 = vmatprep.subr.mxu0 0.0
    %483 = vmatpush2.msra.mxu0 0.0
    %484 = vmatprep.subr.mxu0 0.0
    %485 = vmatpush2.msra.mxu0 0.0
    %486 = vmatprep.subr.mxu0 0.0
    %487 = vmatpush2.msra.mxu0 0.0
    %488 = vmatprep.subr.mxu0 0.0
    %489 = vmatpush2.msra.mxu0 0.0
    %490 = vmatprep.subr.mxu0 0.0
    %491 = vmatpush2.msra.mxu0 0.0
    %492 = vmatprep.subr.mxu0 0.0
    %493 = vmatpush2.msra.mxu0 0.0
    %494 = vmatprep.subr.mxu0 0.0
    %495 = vmatpush2.msra.mxu0 0.0
    %496 = vmatprep.subr.mxu0 0.0
    %497 = vmatpush2.msra.mxu0 0.0
    %498 = vmatprep.mubr.f32.mxu0 0.0
    %v499 = vand.u32 %v93, 4294901760
    %500 = vmatmul.mubr.f32.gmra.mxu0 %v499
    %v501 = vpop.f32.mrf.mxu0
    %v502 = vadd.f32 %v419, %v501
    %v503 = vpop.f32.mrf.mxu0
    %504 = vdwg.mxu0
    %505 = vmatprep.subr.mxu0 0.0
    %506 = vmatpush1.msra.mxu0 0.0
    %507 = vmatprep.subr.mxu0 0.0
    %508 = vmatpush1.msra.mxu0 0.0
    %509 = vmatprep.subr.mxu0 0.0
    %510 = vmatpush1.msra.mxu0 0.0
    %511 = vmatprep.subr.mxu0 0.0
    %512 = vmatpush1.msra.mxu0 0.0
    %513 = vmatprep.subr.mxu0 0.0
    %514 = vmatpush1.msra.mxu0 0.0
    %515 = vmatprep.subr.mxu0 0.0
    %516 = vmatpush1.msra.mxu0 0.0
    %517 = vmatprep.subr.mxu0 0.0
    %518 = vmatpush1.msra.mxu0 0.0
    %519 = vmatprep.subr.mxu0 0.0
    %520 = vmatpush1.msra.mxu0 0.0
    %521 = vmatprep.subr.mxu0 0.0
    %522 = vmatpush1.msra.mxu0 0.0
    %523 = vmatprep.subr.mxu0 0.0
    %524 = vmatpush1.msra.mxu0 0.0
    %525 = vmatprep.subr.mxu0 0.0
    %526 = vmatpush1.msra.mxu0 0.0
    %527 = vmatprep.subr.mxu0 0.0
    %528 = vmatpush1.msra.mxu0 0.0
    %529 = vmatprep.subr.mxu0 0.0
    %v530 = vand.u32 %v90, 4294901760
    %531 = vmatpush1.msra.mxu0 %v530
    %532 = vmatprep.subr.mxu0 0.0
    %v533 = vand.u32 %v89, 4294901760
    %534 = vmatpush1.msra.mxu0 %v533
    %535 = vmatprep.subr.mxu0 0.0
    %v536 = vand.u32 %v88, 4294901760
    %537 = vmatpush1.msra.mxu0 %v536
    %538 = vmatprep.subr.mxu0 0.0
    %v539 = vand.u32 %v87, 4294901760
    %540 = vmatpush1.msra.mxu0 %v539
    %541 = vmatprep.subr.mxu0 0.0
    %542 = vmatpush2.msra.mxu0 0.0
    %543 = vmatprep.subr.mxu0 0.0
    %544 = vmatpush2.msra.mxu0 0.0
    %545 = vmatprep.subr.mxu0 0.0
    %546 = vmatpush2.msra.mxu0 0.0
    %547 = vmatprep.subr.mxu0 0.0
    %548 = vmatpush2.msra.mxu0 0.0
    %549 = vmatprep.subr.mxu0 0.0
    %550 = vmatpush2.msra.mxu0 0.0
    %551 = vmatprep.subr.mxu0 0.0
    %552 = vmatpush2.msra.mxu0 0.0
    %553 = vmatprep.subr.mxu0 0.0
    %554 = vmatpush2.msra.mxu0 0.0
    %555 = vmatprep.subr.mxu0 0.0
    %556 = vmatpush2.msra.mxu0 0.0
    %557 = vmatprep.subr.mxu0 0.0
    %558 = vmatpush2.msra.mxu0 0.0
    %559 = vmatprep.subr.mxu0 0.0
    %560 = vmatpush2.msra.mxu0 0.0
    %561 = vmatprep.subr.mxu0 0.0
    %562 = vmatpush2.msra.mxu0 0.0
    %563 = vmatprep.subr.mxu0 0.0
    %564 = vmatpush2.msra.mxu0 0.0
    %565 = vmatprep.subr.mxu0 0.0
    %566 = vmatpush2.msra.mxu0 0.0
    %567 = vmatprep.subr.mxu0 0.0
    %568 = vmatpush2.msra.mxu0 0.0
    %569 = vmatprep.subr.mxu0 0.0
    %570 = vmatpush2.msra.mxu0 0.0
    %571 = vmatprep.subr.mxu0 0.0
    %572 = vmatpush2.msra.mxu0 0.0
    %573 = vmatprep.mubr.f32.mxu0 0.0
    %v574 = vand.u32 %v93, 4294901760
    %575 = vmatmul.mubr.f32.gmra.mxu0 %v574
    %v576 = vpop.f32.mrf.mxu0
    %v577 = vadd.f32 %v502, %v576
    %v578 = vpop.f32.mrf.mxu0
    %579 = vdwg.mxu0
    %v580 = vld [vmem:[#allocation9] sm:$0xff]
    %v581 = vld [vmem:[#allocation9 + $0x8] sm:$0xff]
    %v582 = vstv %s84
    %v583 = vmul.f32 %v582, %v85
    %vm584 = vcmask 130048
    %v586 = vsel %vm584, %v85, 0
    %588 = vmatprep.subr.mxu0 0.0
    %589 = vmatpush1.msra.mxu0 0.0
    %590 = vmatprep.subr.mxu0 0.0
    %591 = vmatpush1.msra.mxu0 0.0
    %592 = vmatprep.subr.mxu0 0.0
    %593 = vmatpush1.msra.mxu0 0.0
    %594 = vmatprep.subr.mxu0 0.0
    %595 = vmatpush1.msra.mxu0 0.0
    %596 = vmatprep.subr.mxu0 0.0
    %597 = vmatpush1.msra.mxu0 0.0
    %598 = vmatprep.subr.mxu0 0.0
    %599 = vmatpush1.msra.mxu0 0.0
    %600 = vmatprep.subr.mxu0 0.0
    %601 = vmatpush1.msra.mxu0 0.0
    %602 = vmatprep.subr.mxu0 0.0
    %603 = vmatpush1.msra.mxu0 0.0
    %604 = vmatprep.subr.mxu0 0.0
    %605 = vmatpush1.msra.mxu0 0.0
    %606 = vmatprep.subr.mxu0 0.0
    %607 = vmatpush1.msra.mxu0 0.0
    %608 = vmatprep.subr.mxu0 0.0
    %609 = vmatpush1.msra.mxu0 0.0
    %610 = vmatprep.subr.mxu0 0.0
    %611 = vmatpush1.msra.mxu0 0.0
    %612 = vmatprep.subr.mxu0 0.0
    %613 = vmatpush1.msra.mxu0 0.0
    %614 = vmatprep.subr.mxu0 0.0
    %615 = vmatpush1.msra.mxu0 0.0
    %616 = vmatprep.subr.mxu0 0.0
    %v617 = vand.u32 %v581, 4294901760
    %618 = vmatpush1.msra.mxu0 %v617
    %619 = vmatprep.subr.mxu0 0.0
    %v620 = vand.u32 %v580, 4294901760
    %621 = vmatpush1.msra.mxu0 %v620
    %622 = vmatprep.subr.mxu0 0.0
    %623 = vmatpush2.msra.mxu0 0.0
    %624 = vmatprep.subr.mxu0 0.0
    %625 = vmatpush2.msra.mxu0 0.0
    %626 = vmatprep.subr.mxu0 0.0
    %627 = vmatpush2.msra.mxu0 0.0
    %628 = vmatprep.subr.mxu0 0.0
    %629 = vmatpush2.msra.mxu0 0.0
    %630 = vmatprep.subr.mxu0 0.0
    %631 = vmatpush2.msra.mxu0 0.0
    %632 = vmatprep.subr.mxu0 0.0
    %633 = vmatpush2.msra.mxu0 0.0
    %634 = vmatprep.subr.mxu0 0.0
    %635 = vmatpush2.msra.mxu0 0.0
    %636 = vmatprep.subr.mxu0 0.0
    %637 = vmatpush2.msra.mxu0 0.0
    %638 = vmatprep.subr.mxu0 0.0
    %639 = vmatpush2.msra.mxu0 0.0
    %640 = vmatprep.subr.mxu0 0.0
    %641 = vmatpush2.msra.mxu0 0.0
    %642 = vmatprep.subr.mxu0 0.0
    %643 = vmatpush2.msra.mxu0 0.0
    %644 = vmatprep.subr.mxu0 0.0
    %645 = vmatpush2.msra.mxu0 0.0
    %646 = vmatprep.subr.mxu0 0.0
    %647 = vmatpush2.msra.mxu0 0.0
    %648 = vmatprep.subr.mxu0 0.0
    %649 = vmatpush2.msra.mxu0 0.0
    %650 = vmatprep.subr.mxu0 0.0
    %651 = vmatpush2.msra.mxu0 0.0
    %652 = vmatprep.subr.mxu0 0.0
    %653 = vmatpush2.msra.mxu0 0.0
    %654 = vmatprep.mubr.f32.mxu0 0.0
    %v655 = vand.u32 %v586, 4294901760
    %v656 = vsub.f32 %v586, %v655
    %v657 = vand.u32 %v656, 4294901760
    %v658 = vsub.f32 %v656, %v657
    %v659 = vand.u32 %v658, 4294901760
    %660 = vmatmul.mubr.f32.gmra.mxu0 %v659
    %v661 = vpop.f32.mrf.mxu0
    %v662 = vadd.f32 %v583, %v661
    %v663 = vpop.f32.mrf.mxu0
    %664 = vdwg.mxu0
    %665 = vmatprep.subr.mxu0 0.0
    %666 = vmatpush1.msra.mxu0 0.0
    %667 = vmatprep.subr.mxu0 0.0
    %668 = vmatpush1.msra.mxu0 0.0
    %669 = vmatprep.subr.mxu0 0.0
    %670 = vmatpush1.msra.mxu0 0.0
    %671 = vmatprep.subr.mxu0 0.0
    %672 = vmatpush1.msra.mxu0 0.0
    %673 = vmatprep.subr.mxu0 0.0
    %674 = vmatpush1.msra.mxu0 0.0
    %675 = vmatprep.subr.mxu0 0.0
    %676 = vmatpush1.msra.mxu0 0.0
    %677 = vmatprep.subr.mxu0 0.0
    %678 = vmatpush1.msra.mxu0 0.0
    %679 = vmatprep.subr.mxu0 0.0
    %680 = vmatpush1.msra.mxu0 0.0
    %681 = vmatprep.subr.mxu0 0.0
    %682 = vmatpush1.msra.mxu0 0.0
    %683 = vmatprep.subr.mxu0 0.0
    %684 = vmatpush1.msra.mxu0 0.0
    %685 = vmatprep.subr.mxu0 0.0
    %686 = vmatpush1.msra.mxu0 0.0
    %687 = vmatprep.subr.mxu0 0.0
    %688 = vmatpush1.msra.mxu0 0.0
    %689 = vmatprep.subr.mxu0 0.0
    %690 = vmatpush1.msra.mxu0 0.0
    %691 = vmatprep.subr.mxu0 0.0
    %692 = vmatpush1.msra.mxu0 0.0
    %693 = vmatprep.subr.mxu0 0.0
    %v694 = vand.u32 %v581, 4294901760
    %v695 = vsub.f32 %v581, %v694
    %v696 = vand.u32 %v695, 4294901760
    %v697 = vsub.f32 %v695, %v696
    %v698 = vand.u32 %v697, 4294901760
    %699 = vmatpush1.msra.mxu0 %v698
    %700 = vmatprep.subr.mxu0 0.0
    %v701 = vand.u32 %v580, 4294901760
    %v702 = vsub.f32 %v580, %v701
    %v703 = vand.u32 %v702, 4294901760
    %v704 = vsub.f32 %v702, %v703
    %v705 = vand.u32 %v704, 4294901760
    %706 = vmatpush1.msra.mxu0 %v705
    %707 = vmatprep.subr.mxu0 0.0
    %708 = vmatpush2.msra.mxu0 0.0
    %709 = vmatprep.subr.mxu0 0.0
    %710 = vmatpush2.msra.mxu0 0.0
    %711 = vmatprep.subr.mxu0 0.0
    %712 = vmatpush2.msra.mxu0 0.0
    %713 = vmatprep.subr.mxu0 0.0
    %714 = vmatpush2.msra.mxu0 0.0
    %715 = vmatprep.subr.mxu0 0.0
    %716 = vmatpush2.msra.mxu0 0.0
    %717 = vmatprep.subr.mxu0 0.0
    %718 = vmatpush2.msra.mxu0 0.0
    %719 = vmatprep.subr.mxu0 0.0
    %720 = vmatpush2.msra.mxu0 0.0
    %721 = vmatprep.subr.mxu0 0.0
    %722 = vmatpush2.msra.mxu0 0.0
    %723 = vmatprep.subr.mxu0 0.0
    %724 = vmatpush2.msra.mxu0 0.0
    %725 = vmatprep.subr.mxu0 0.0
    %726 = vmatpush2.msra.mxu0 0.0
    %727 = vmatprep.subr.mxu0 0.0
    %728 = vmatpush2.msra.mxu0 0.0
    %729 = vmatprep.subr.mxu0 0.0
    %730 = vmatpush2.msra.mxu0 0.0
    %731 = vmatprep.subr.mxu0 0.0
    %732 = vmatpush2.msra.mxu0 0.0
    %733 = vmatprep.subr.mxu0 0.0
    %734 = vmatpush2.msra.mxu0 0.0
    %735 = vmatprep.subr.mxu0 0.0
    %736 = vmatpush2.msra.mxu0 0.0
    %737 = vmatprep.subr.mxu0 0.0
    %738 = vmatpush2.msra.mxu0 0.0
    %739 = vmatprep.mubr.f32.mxu0 0.0
    %v740 = vand.u32 %v586, 4294901760
    %741 = vmatmul.mubr.f32.gmra.mxu0 %v740
    %v742 = vpop.f32.mrf.mxu0
    %v743 = vadd.f32 %v662, %v742
    %v744 = vpop.f32.mrf.mxu0
    %745 = vdwg.mxu0
    %746 = vmatprep.subr.mxu0 0.0
    %747 = vmatpush1.msra.mxu0 0.0
    %748 = vmatprep.subr.mxu0 0.0
    %749 = vmatpush1.msra.mxu0 0.0
    %750 = vmatprep.subr.mxu0 0.0
    %751 = vmatpush1.msra.mxu0 0.0
    %752 = vmatprep.subr.mxu0 0.0
    %753 = vmatpush1.msra.mxu0 0.0
    %754 = vmatprep.subr.mxu0 0.0
    %755 = vmatpush1.msra.mxu0 0.0
    %756 = vmatprep.subr.mxu0 0.0
    %757 = vmatpush1.msra.mxu0 0.0
    %758 = vmatprep.subr.mxu0 0.0
    %759 = vmatpush1.msra.mxu0 0.0
    %760 = vmatprep.subr.mxu0 0.0
    %761 = vmatpush1.msra.mxu0 0.0
    %762 = vmatprep.subr.mxu0 0.0
    %763 = vmatpush1.msra.mxu0 0.0
    %764 = vmatprep.subr.mxu0 0.0
    %765 = vmatpush1.msra.mxu0 0.0
    %766 = vmatprep.subr.mxu0 0.0
    %767 = vmatpush1.msra.mxu0 0.0
    %768 = vmatprep.subr.mxu0 0.0
    %769 = vmatpush1.msra.mxu0 0.0
    %770 = vmatprep.subr.mxu0 0.0
    %771 = vmatpush1.msra.mxu0 0.0
    %772 = vmatprep.subr.mxu0 0.0
    %773 = vmatpush1.msra.mxu0 0.0
    %774 = vmatprep.subr.mxu0 0.0
    %v775 = vand.u32 %v581, 4294901760
    %v776 = vsub.f32 %v581, %v775
    %777 = vmatpush1.msra.mxu0 %v776
    %778 = vmatprep.subr.mxu0 0.0
    %v779 = vand.u32 %v580, 4294901760
    %v780 = vsub.f32 %v580, %v779
    %781 = vmatpush1.msra.mxu0 %v780
    %782 = vmatprep.subr.mxu0 0.0
    %783 = vmatpush2.msra.mxu0 0.0
    %784 = vmatprep.subr.mxu0 0.0
    %785 = vmatpush2.msra.mxu0 0.0
    %786 = vmatprep.subr.mxu0 0.0
    %787 = vmatpush2.msra.mxu0 0.0
    %788 = vmatprep.subr.mxu0 0.0
    %789 = vmatpush2.msra.mxu0 0.0
    %790 = vmatprep.subr.mxu0 0.0
    %791 = vmatpush2.msra.mxu0 0.0
    %792 = vmatprep.subr.mxu0 0.0
    %793 = vmatpush2.msra.mxu0 0.0
    %794 = vmatprep.subr.mxu0 0.0
    %795 = vmatpush2.msra.mxu0 0.0
    %796 = vmatprep.subr.mxu0 0.0
    %797 = vmatpush2.msra.mxu0 0.0
    %798 = vmatprep.subr.mxu0 0.0
    %799 = vmatpush2.msra.mxu0 0.0
    %800 = vmatprep.subr.mxu0 0.0
    %801 = vmatpush2.msra.mxu0 0.0
    %802 = vmatprep.subr.mxu0 0.0
    %803 = vmatpush2.msra.mxu0 0.0
    %804 = vmatprep.subr.mxu0 0.0
    %805 = vmatpush2.msra.mxu0 0.0
    %806 = vmatprep.subr.mxu0 0.0
    %807 = vmatpush2.msra.mxu0 0.0
    %808 = vmatprep.subr.mxu0 0.0
    %809 = vmatpush2.msra.mxu0 0.0
    %810 = vmatprep.subr.mxu0 0.0
    %811 = vmatpush2.msra.mxu0 0.0
    %812 = vmatprep.subr.mxu0 0.0
    %813 = vmatpush2.msra.mxu0 0.0
    %814 = vmatprep.mubr.f32.mxu0 0.0
    %v815 = vand.u32 %v586, 4294901760
    %v816 = vsub.f32 %v586, %v815
    %817 = vmatmul.mubr.f32.gmra.mxu0 %v816
    %v818 = vpop.f32.mrf.mxu0
    %v819 = vadd.f32 %v743, %v818
    %v820 = vpop.f32.mrf.mxu0
    %821 = vdwg.mxu0
    %822 = vmatprep.subr.mxu0 0.0
    %823 = vmatpush1.msra.mxu0 0.0
    %824 = vmatprep.subr.mxu0 0.0
    %825 = vmatpush1.msra.mxu0 0.0
    %826 = vmatprep.subr.mxu0 0.0
    %827 = vmatpush1.msra.mxu0 0.0
    %828 = vmatprep.subr.mxu0 0.0
    %829 = vmatpush1.msra.mxu0 0.0
    %830 = vmatprep.subr.mxu0 0.0
    %831 = vmatpush1.msra.mxu0 0.0
    %832 = vmatprep.subr.mxu0 0.0
    %833 = vmatpush1.msra.mxu0 0.0
    %834 = vmatprep.subr.mxu0 0.0
    %835 = vmatpush1.msra.mxu0 0.0
    %836 = vmatprep.subr.mxu0 0.0
    %837 = vmatpush1.msra.mxu0 0.0
    %838 = vmatprep.subr.mxu0 0.0
    %839 = vmatpush1.msra.mxu0 0.0
    %840 = vmatprep.subr.mxu0 0.0
    %841 = vmatpush1.msra.mxu0 0.0
    %842 = vmatprep.subr.mxu0 0.0
    %843 = vmatpush1.msra.mxu0 0.0
    %844 = vmatprep.subr.mxu0 0.0
    %845 = vmatpush1.msra.mxu0 0.0
    %846 = vmatprep.subr.mxu0 0.0
    %847 = vmatpush1.msra.mxu0 0.0
    %848 = vmatprep.subr.mxu0 0.0
    %849 = vmatpush1.msra.mxu0 0.0
    %850 = vmatprep.subr.mxu0 0.0
    %v851 = vand.u32 %v581, 4294901760
    %852 = vmatpush1.msra.mxu0 %v851
    %853 = vmatprep.subr.mxu0 0.0
    %v854 = vand.u32 %v580, 4294901760
    %855 = vmatpush1.msra.mxu0 %v854
    %856 = vmatprep.subr.mxu0 0.0
    %857 = vmatpush2.msra.mxu0 0.0
    %858 = vmatprep.subr.mxu0 0.0
    %859 = vmatpush2.msra.mxu0 0.0
    %860 = vmatprep.subr.mxu0 0.0
    %861 = vmatpush2.msra.mxu0 0.0
    %862 = vmatprep.subr.mxu0 0.0
    %863 = vmatpush2.msra.mxu0 0.0
    %864 = vmatprep.subr.mxu0 0.0
    %865 = vmatpush2.msra.mxu0 0.0
    %866 = vmatprep.subr.mxu0 0.0
    %867 = vmatpush2.msra.mxu0 0.0
    %868 = vmatprep.subr.mxu0 0.0
    %869 = vmatpush2.msra.mxu0 0.0
    %870 = vmatprep.subr.mxu0 0.0
    %871 = vmatpush2.msra.mxu0 0.0
    %872 = vmatprep.subr.mxu0 0.0
    %873 = vmatpush2.msra.mxu0 0.0
    %874 = vmatprep.subr.mxu0 0.0
    %875 = vmatpush2.msra.mxu0 0.0
    %876 = vmatprep.subr.mxu0 0.0
    %877 = vmatpush2.msra.mxu0 0.0
    %878 = vmatprep.subr.mxu0 0.0
    %879 = vmatpush2.msra.mxu0 0.0
    %880 = vmatprep.subr.mxu0 0.0
    %881 = vmatpush2.msra.mxu0 0.0
    %882 = vmatprep.subr.mxu0 0.0
    %883 = vmatpush2.msra.mxu0 0.0
    %884 = vmatprep.subr.mxu0 0.0
    %885 = vmatpush2.msra.mxu0 0.0
    %886 = vmatprep.subr.mxu0 0.0
    %887 = vmatpush2.msra.mxu0 0.0
    %888 = vmatprep.mubr.f32.mxu0 0.0
    %v889 = vand.u32 %v586, 4294901760
    %v890 = vsub.f32 %v586, %v889
    %v891 = vand.u32 %v890, 4294901760
    %892 = vmatmul.mubr.f32.gmra.mxu0 %v891
    %v893 = vpop.f32.mrf.mxu0
    %v894 = vadd.f32 %v819, %v893
    %v895 = vpop.f32.mrf.mxu0
    %896 = vdwg.mxu0
    %897 = vmatprep.subr.mxu0 0.0
    %898 = vmatpush1.msra.mxu0 0.0
    %899 = vmatprep.subr.mxu0 0.0
    %900 = vmatpush1.msra.mxu0 0.0
    %901 = vmatprep.subr.mxu0 0.0
    %902 = vmatpush1.msra.mxu0 0.0
    %903 = vmatprep.subr.mxu0 0.0
    %904 = vmatpush1.msra.mxu0 0.0
    %905 = vmatprep.subr.mxu0 0.0
    %906 = vmatpush1.msra.mxu0 0.0
    %907 = vmatprep.subr.mxu0 0.0
    %908 = vmatpush1.msra.mxu0 0.0
    %909 = vmatprep.subr.mxu0 0.0
    %910 = vmatpush1.msra.mxu0 0.0
    %911 = vmatprep.subr.mxu0 0.0
    %912 = vmatpush1.msra.mxu0 0.0
    %913 = vmatprep.subr.mxu0 0.0
    %914 = vmatpush1.msra.mxu0 0.0
    %915 = vmatprep.subr.mxu0 0.0
    %916 = vmatpush1.msra.mxu0 0.0
    %917 = vmatprep.subr.mxu0 0.0
    %918 = vmatpush1.msra.mxu0 0.0
    %919 = vmatprep.subr.mxu0 0.0
    %920 = vmatpush1.msra.mxu0 0.0
    %921 = vmatprep.subr.mxu0 0.0
    %922 = vmatpush1.msra.mxu0 0.0
    %923 = vmatprep.subr.mxu0 0.0
    %924 = vmatpush1.msra.mxu0 0.0
    %925 = vmatprep.subr.mxu0 0.0
    %v926 = vand.u32 %v581, 4294901760
    %v927 = vsub.f32 %v581, %v926
    %v928 = vand.u32 %v927, 4294901760
    %929 = vmatpush1.msra.mxu0 %v928
    %930 = vmatprep.subr.mxu0 0.0
    %v931 = vand.u32 %v580, 4294901760
    %v932 = vsub.f32 %v580, %v931
    %v933 = vand.u32 %v932, 4294901760
    %934 = vmatpush1.msra.mxu0 %v933
    %935 = vmatprep.subr.mxu0 0.0
    %936 = vmatpush2.msra.mxu0 0.0
    %937 = vmatprep.subr.mxu0 0.0
    %938 = vmatpush2.msra.mxu0 0.0
    %939 = vmatprep.subr.mxu0 0.0
    %940 = vmatpush2.msra.mxu0 0.0
    %941 = vmatprep.subr.mxu0 0.0
    %942 = vmatpush2.msra.mxu0 0.0
    %943 = vmatprep.subr.mxu0 0.0
    %944 = vmatpush2.msra.mxu0 0.0
    %945 = vmatprep.subr.mxu0 0.0
    %946 = vmatpush2.msra.mxu0 0.0
    %947 = vmatprep.subr.mxu0 0.0
    %948 = vmatpush2.msra.mxu0 0.0
    %949 = vmatprep.subr.mxu0 0.0
    %950 = vmatpush2.msra.mxu0 0.0
    %951 = vmatprep.subr.mxu0 0.0
    %952 = vmatpush2.msra.mxu0 0.0
    %953 = vmatprep.subr.mxu0 0.0
    %954 = vmatpush2.msra.mxu0 0.0
    %955 = vmatprep.subr.mxu0 0.0
    %956 = vmatpush2.msra.mxu0 0.0
    %957 = vmatprep.subr.mxu0 0.0
    %958 = vmatpush2.msra.mxu0 0.0
    %959 = vmatprep.subr.mxu0 0.0
    %960 = vmatpush2.msra.mxu0 0.0
    %961 = vmatprep.subr.mxu0 0.0
    %962 = vmatpush2.msra.mxu0 0.0
    %963 = vmatprep.subr.mxu0 0.0
    %964 = vmatpush2.msra.mxu0 0.0
    %965 = vmatprep.subr.mxu0 0.0
    %966 = vmatpush2.msra.mxu0 0.0
    %967 = vmatprep.mubr.f32.mxu0 0.0
    %v968 = vand.u32 %v586, 4294901760
    %969 = vmatmul.mubr.f32.gmra.mxu0 %v968
    %v970 = vpop.f32.mrf.mxu0
    %v971 = vadd.f32 %v894, %v970
    %v972 = vpop.f32.mrf.mxu0
    %973 = vdwg.mxu0
    %974 = vmatprep.subr.mxu0 0.0
    %975 = vmatpush1.msra.mxu0 0.0
    %976 = vmatprep.subr.mxu0 0.0
    %977 = vmatpush1.msra.mxu0 0.0
    %978 = vmatprep.subr.mxu0 0.0
    %979 = vmatpush1.msra.mxu0 0.0
    %980 = vmatprep.subr.mxu0 0.0
    %981 = vmatpush1.msra.mxu0 0.0
    %982 = vmatprep.subr.mxu0 0.0
    %983 = vmatpush1.msra.mxu0 0.0
    %984 = vmatprep.subr.mxu0 0.0
    %985 = vmatpush1.msra.mxu0 0.0
    %986 = vmatprep.subr.mxu0 0.0
    %987 = vmatpush1.msra.mxu0 0.0
    %988 = vmatprep.subr.mxu0 0.0
    %989 = vmatpush1.msra.mxu0 0.0
    %990 = vmatprep.subr.mxu0 0.0
    %991 = vmatpush1.msra.mxu0 0.0
    %992 = vmatprep.subr.mxu0 0.0
    %993 = vmatpush1.msra.mxu0 0.0
    %994 = vmatprep.subr.mxu0 0.0
    %995 = vmatpush1.msra.mxu0 0.0
    %996 = vmatprep.subr.mxu0 0.0
    %997 = vmatpush1.msra.mxu0 0.0
    %998 = vmatprep.subr.mxu0 0.0
    %999 = vmatpush1.msra.mxu0 0.0
    %1000 = vmatprep.subr.mxu0 0.0
    %1001 = vmatpush1.msra.mxu0 0.0
    %1002 = vmatprep.subr.mxu0 0.0
    %v1003 = vand.u32 %v581, 4294901760
    %1004 = vmatpush1.msra.mxu0 %v1003
    %1005 = vmatprep.subr.mxu0 0.0
    %v1006 = vand.u32 %v580, 4294901760
    %1007 = vmatpush1.msra.mxu0 %v1006
    %1008 = vmatprep.subr.mxu0 0.0
    %1009 = vmatpush2.msra.mxu0 0.0
    %1010 = vmatprep.subr.mxu0 0.0
    %1011 = vmatpush2.msra.mxu0 0.0
    %1012 = vmatprep.subr.mxu0 0.0
    %1013 = vmatpush2.msra.mxu0 0.0
    %1014 = vmatprep.subr.mxu0 0.0
    %1015 = vmatpush2.msra.mxu0 0.0
    %1016 = vmatprep.subr.mxu0 0.0
    %1017 = vmatpush2.msra.mxu0 0.0
    %1018 = vmatprep.subr.mxu0 0.0
    %1019 = vmatpush2.msra.mxu0 0.0
    %1020 = vmatprep.subr.mxu0 0.0
    %1021 = vmatpush2.msra.mxu0 0.0
    %1022 = vmatprep.subr.mxu0 0.0
    %1023 = vmatpush2.msra.mxu0 0.0
    %1024 = vmatprep.subr.mxu0 0.0
    %1025 = vmatpush2.msra.mxu0 0.0
    %1026 = vmatprep.subr.mxu0 0.0
    %1027 = vmatpush2.msra.mxu0 0.0
    %1028 = vmatprep.subr.mxu0 0.0
    %1029 = vmatpush2.msra.mxu0 0.0
    %1030 = vmatprep.subr.mxu0 0.0
    %1031 = vmatpush2.msra.mxu0 0.0
    %1032 = vmatprep.subr.mxu0 0.0
    %1033 = vmatpush2.msra.mxu0 0.0
    %1034 = vmatprep.subr.mxu0 0.0
    %1035 = vmatpush2.msra.mxu0 0.0
    %1036 = vmatprep.subr.mxu0 0.0
    %1037 = vmatpush2.msra.mxu0 0.0
    %1038 = vmatprep.subr.mxu0 0.0
    %1039 = vmatpush2.msra.mxu0 0.0
    %1040 = vmatprep.mubr.f32.mxu0 0.0
    %v1041 = vand.u32 %v586, 4294901760
    %1042 = vmatmul.mubr.f32.gmra.mxu0 %v1041
    %v1043 = vpop.f32.mrf.mxu0
    %v1044 = vadd.f32 %v971, %v1043
    %v1045 = vpop.f32.mrf.mxu0
    %1046 = vdwg.mxu0
    %v1047 = vstv %s83
    %v1048 = vadd.f32 %v1044, %v1047
    %v1049 = vrcp.pop %v1048
    %v1050 = vmul.f32 %v577, %v1049
    %v1051 = vmul.f32 %v1050, %v85
    %s1052 = scalar_lea.vmem [#allocation9], 16
    %v1053 = vld [vmem:[%s1052] sm:$0xff]
    %v1054 = vld [vmem:[%s1052 + $0x8] sm:$0xff]
    %v1055 = vmul.f32 %v582, %v1051
    %v1057 = vsel %vm584, %v1051, 0
    %1059 = vmatprep.subr.mxu0 0.0
    %1060 = vmatpush1.msra.mxu0 0.0
    %1061 = vmatprep.subr.mxu0 0.0
    %1062 = vmatpush1.msra.mxu0 0.0
    %1063 = vmatprep.subr.mxu0 0.0
    %1064 = vmatpush1.msra.mxu0 0.0
    %1065 = vmatprep.subr.mxu0 0.0
    %1066 = vmatpush1.msra.mxu0 0.0
    %1067 = vmatprep.subr.mxu0 0.0
    %1068 = vmatpush1.msra.mxu0 0.0
    %1069 = vmatprep.subr.mxu0 0.0
    %1070 = vmatpush1.msra.mxu0 0.0
    %1071 = vmatprep.subr.mxu0 0.0
    %1072 = vmatpush1.msra.mxu0 0.0
    %1073 = vmatprep.subr.mxu0 0.0
    %1074 = vmatpush1.msra.mxu0 0.0
    %1075 = vmatprep.subr.mxu0 0.0
    %1076 = vmatpush1.msra.mxu0 0.0
    %1077 = vmatprep.subr.mxu0 0.0
    %1078 = vmatpush1.msra.mxu0 0.0
    %1079 = vmatprep.subr.mxu0 0.0
    %1080 = vmatpush1.msra.mxu0 0.0
    %1081 = vmatprep.subr.mxu0 0.0
    %1082 = vmatpush1.msra.mxu0 0.0
    %1083 = vmatprep.subr.mxu0 0.0
    %1084 = vmatpush1.msra.mxu0 0.0
    %1085 = vmatprep.subr.mxu0 0.0
    %1086 = vmatpush1.msra.mxu0 0.0
    %1087 = vmatprep.subr.mxu0 0.0
    %v1088 = vand.u32 %v1054, 4294901760
    %1089 = vmatpush1.msra.mxu0 %v1088
    %1090 = vmatprep.subr.mxu0 0.0
    %v1091 = vand.u32 %v1053, 4294901760
    %1092 = vmatpush1.msra.mxu0 %v1091
    %1093 = vmatprep.subr.mxu0 0.0
    %1094 = vmatpush2.msra.mxu0 0.0
    %1095 = vmatprep.subr.mxu0 0.0
    %1096 = vmatpush2.msra.mxu0 0.0
    %1097 = vmatprep.subr.mxu0 0.0
    %1098 = vmatpush2.msra.mxu0 0.0
    %1099 = vmatprep.subr.mxu0 0.0
    %1100 = vmatpush2.msra.mxu0 0.0
    %1101 = vmatprep.subr.mxu0 0.0
    %1102 = vmatpush2.msra.mxu0 0.0
    %1103 = vmatprep.subr.mxu0 0.0
    %1104 = vmatpush2.msra.mxu0 0.0
    %1105 = vmatprep.subr.mxu0 0.0
    %1106 = vmatpush2.msra.mxu0 0.0
    %1107 = vmatprep.subr.mxu0 0.0
    %1108 = vmatpush2.msra.mxu0 0.0
    %1109 = vmatprep.subr.mxu0 0.0
    %1110 = vmatpush2.msra.mxu0 0.0
    %1111 = vmatprep.subr.mxu0 0.0
    %1112 = vmatpush2.msra.mxu0 0.0
    %1113 = vmatprep.subr.mxu0 0.0
    %1114 = vmatpush2.msra.mxu0 0.0
    %1115 = vmatprep.subr.mxu0 0.0
    %1116 = vmatpush2.msra.mxu0 0.0
    %1117 = vmatprep.subr.mxu0 0.0
    %1118 = vmatpush2.msra.mxu0 0.0
    %1119 = vmatprep.subr.mxu0 0.0
    %1120 = vmatpush2.msra.mxu0 0.0
    %1121 = vmatprep.subr.mxu0 0.0
    %1122 = vmatpush2.msra.mxu0 0.0
    %1123 = vmatprep.subr.mxu0 0.0
    %1124 = vmatpush2.msra.mxu0 0.0
    %1125 = vmatprep.mubr.f32.mxu0 0.0
    %v1126 = vand.u32 %v1057, 4294901760
    %v1127 = vsub.f32 %v1057, %v1126
    %v1128 = vand.u32 %v1127, 4294901760
    %v1129 = vsub.f32 %v1127, %v1128
    %v1130 = vand.u32 %v1129, 4294901760
    %1131 = vmatmul.mubr.f32.gmra.mxu0 %v1130
    %v1132 = vpop.f32.mrf.mxu0
    %v1133 = vadd.f32 %v1055, %v1132
    %v1134 = vpop.f32.mrf.mxu0
    %1135 = vdwg.mxu0
    %1136 = vmatprep.subr.mxu0 0.0
    %1137 = vmatpush1.msra.mxu0 0.0
    %1138 = vmatprep.subr.mxu0 0.0
    %1139 = vmatpush1.msra.mxu0 0.0
    %1140 = vmatprep.subr.mxu0 0.0
    %1141 = vmatpush1.msra.mxu0 0.0
    %1142 = vmatprep.subr.mxu0 0.0
    %1143 = vmatpush1.msra.mxu0 0.0
    %1144 = vmatprep.subr.mxu0 0.0
    %1145 = vmatpush1.msra.mxu0 0.0
    %1146 = vmatprep.subr.mxu0 0.0
    %1147 = vmatpush1.msra.mxu0 0.0
    %1148 = vmatprep.subr.mxu0 0.0
    %1149 = vmatpush1.msra.mxu0 0.0
    %1150 = vmatprep.subr.mxu0 0.0
    %1151 = vmatpush1.msra.mxu0 0.0
    %1152 = vmatprep.subr.mxu0 0.0
    %1153 = vmatpush1.msra.mxu0 0.0
    %1154 = vmatprep.subr.mxu0 0.0
    %1155 = vmatpush1.msra.mxu0 0.0
    %1156 = vmatprep.subr.mxu0 0.0
    %1157 = vmatpush1.msra.mxu0 0.0
    %1158 = vmatprep.subr.mxu0 0.0
    %1159 = vmatpush1.msra.mxu0 0.0
    %1160 = vmatprep.subr.mxu0 0.0
    %1161 = vmatpush1.msra.mxu0 0.0
    %1162 = vmatprep.subr.mxu0 0.0
    %1163 = vmatpush1.msra.mxu0 0.0
    %1164 = vmatprep.subr.mxu0 0.0
    %v1165 = vand.u32 %v1054, 4294901760
    %v1166 = vsub.f32 %v1054, %v1165
    %v1167 = vand.u32 %v1166, 4294901760
    %v1168 = vsub.f32 %v1166, %v1167
    %v1169 = vand.u32 %v1168, 4294901760
    %1170 = vmatpush1.msra.mxu0 %v1169
    %1171 = vmatprep.subr.mxu0 0.0
    %v1172 = vand.u32 %v1053, 4294901760
    %v1173 = vsub.f32 %v1053, %v1172
    %v1174 = vand.u32 %v1173, 4294901760
    %v1175 = vsub.f32 %v1173, %v1174
    %v1176 = vand.u32 %v1175, 4294901760
    %1177 = vmatpush1.msra.mxu0 %v1176
    %1178 = vmatprep.subr.mxu0 0.0
    %1179 = vmatpush2.msra.mxu0 0.0
    %1180 = vmatprep.subr.mxu0 0.0
    %1181 = vmatpush2.msra.mxu0 0.0
    %1182 = vmatprep.subr.mxu0 0.0
    %1183 = vmatpush2.msra.mxu0 0.0
    %1184 = vmatprep.subr.mxu0 0.0
    %1185 = vmatpush2.msra.mxu0 0.0
    %1186 = vmatprep.subr.mxu0 0.0
    %1187 = vmatpush2.msra.mxu0 0.0
    %1188 = vmatprep.subr.mxu0 0.0
    %1189 = vmatpush2.msra.mxu0 0.0
    %1190 = vmatprep.subr.mxu0 0.0
    %1191 = vmatpush2.msra.mxu0 0.0
    %1192 = vmatprep.subr.mxu0 0.0
    %1193 = vmatpush2.msra.mxu0 0.0
    %1194 = vmatprep.subr.mxu0 0.0
    %1195 = vmatpush2.msra.mxu0 0.0
    %1196 = vmatprep.subr.mxu0 0.0
    %1197 = vmatpush2.msra.mxu0 0.0
    %1198 = vmatprep.subr.mxu0 0.0
    %1199 = vmatpush2.msra.mxu0 0.0
    %1200 = vmatprep.subr.mxu0 0.0
    %1201 = vmatpush2.msra.mxu0 0.0
    %1202 = vmatprep.subr.mxu0 0.0
    %1203 = vmatpush2.msra.mxu0 0.0
    %1204 = vmatprep.subr.mxu0 0.0
    %1205 = vmatpush2.msra.mxu0 0.0
    %1206 = vmatprep.subr.mxu0 0.0
    %1207 = vmatpush2.msra.mxu0 0.0
    %1208 = vmatprep.subr.mxu0 0.0
    %1209 = vmatpush2.msra.mxu0 0.0
    %1210 = vmatprep.mubr.f32.mxu0 0.0
    %v1211 = vand.u32 %v1057, 4294901760
    %1212 = vmatmul.mubr.f32.gmra.mxu0 %v1211
    %v1213 = vpop.f32.mrf.mxu0
    %v1214 = vadd.f32 %v1133, %v1213
    %v1215 = vpop.f32.mrf.mxu0
    %1216 = vdwg.mxu0
    %1217 = vmatprep.subr.mxu0 0.0
    %1218 = vmatpush1.msra.mxu0 0.0
    %1219 = vmatprep.subr.mxu0 0.0
    %1220 = vmatpush1.msra.mxu0 0.0
    %1221 = vmatprep.subr.mxu0 0.0
    %1222 = vmatpush1.msra.mxu0 0.0
    %1223 = vmatprep.subr.mxu0 0.0
    %1224 = vmatpush1.msra.mxu0 0.0
    %1225 = vmatprep.subr.mxu0 0.0
    %1226 = vmatpush1.msra.mxu0 0.0
    %1227 = vmatprep.subr.mxu0 0.0
    %1228 = vmatpush1.msra.mxu0 0.0
    %1229 = vmatprep.subr.mxu0 0.0
    %1230 = vmatpush1.msra.mxu0 0.0
    %1231 = vmatprep.subr.mxu0 0.0
    %1232 = vmatpush1.msra.mxu0 0.0
    %1233 = vmatprep.subr.mxu0 0.0
    %1234 = vmatpush1.msra.mxu0 0.0
    %1235 = vmatprep.subr.mxu0 0.0
    %1236 = vmatpush1.msra.mxu0 0.0
    %1237 = vmatprep.subr.mxu0 0.0
    %1238 = vmatpush1.msra.mxu0 0.0
    %1239 = vmatprep.subr.mxu0 0.0
    %1240 = vmatpush1.msra.mxu0 0.0
    %1241 = vmatprep.subr.mxu0 0.0
    %1242 = vmatpush1.msra.mxu0 0.0
    %1243 = vmatprep.subr.mxu0 0.0
    %1244 = vmatpush1.msra.mxu0 0.0
    %1245 = vmatprep.subr.mxu0 0.0
    %v1246 = vand.u32 %v1054, 4294901760
    %v1247 = vsub.f32 %v1054, %v1246
    %1248 = vmatpush1.msra.mxu0 %v1247
    %1249 = vmatprep.subr.mxu0 0.0
    %v1250 = vand.u32 %v1053, 4294901760
    %v1251 = vsub.f32 %v1053, %v1250
    %1252 = vmatpush1.msra.mxu0 %v1251
    %1253 = vmatprep.subr.mxu0 0.0
    %1254 = vmatpush2.msra.mxu0 0.0
    %1255 = vmatprep.subr.mxu0 0.0
    %1256 = vmatpush2.msra.mxu0 0.0
    %1257 = vmatprep.subr.mxu0 0.0
    %1258 = vmatpush2.msra.mxu0 0.0
    %1259 = vmatprep.subr.mxu0 0.0
    %1260 = vmatpush2.msra.mxu0 0.0
    %1261 = vmatprep.subr.mxu0 0.0
    %1262 = vmatpush2.msra.mxu0 0.0
    %1263 = vmatprep.subr.mxu0 0.0
    %1264 = vmatpush2.msra.mxu0 0.0
    %1265 = vmatprep.subr.mxu0 0.0
    %1266 = vmatpush2.msra.mxu0 0.0
    %1267 = vmatprep.subr.mxu0 0.0
    %1268 = vmatpush2.msra.mxu0 0.0
    %1269 = vmatprep.subr.mxu0 0.0
    %1270 = vmatpush2.msra.mxu0 0.0
    %1271 = vmatprep.subr.mxu0 0.0
    %1272 = vmatpush2.msra.mxu0 0.0
    %1273 = vmatprep.subr.mxu0 0.0
    %1274 = vmatpush2.msra.mxu0 0.0
    %1275 = vmatprep.subr.mxu0 0.0
    %1276 = vmatpush2.msra.mxu0 0.0
    %1277 = vmatprep.subr.mxu0 0.0
    %1278 = vmatpush2.msra.mxu0 0.0
    %1279 = vmatprep.subr.mxu0 0.0
    %1280 = vmatpush2.msra.mxu0 0.0
    %1281 = vmatprep.subr.mxu0 0.0
    %1282 = vmatpush2.msra.mxu0 0.0
    %1283 = vmatprep.subr.mxu0 0.0
    %1284 = vmatpush2.msra.mxu0 0.0
    %1285 = vmatprep.mubr.f32.mxu0 0.0
    %v1286 = vand.u32 %v1057, 4294901760
    %v1287 = vsub.f32 %v1057, %v1286
    %1288 = vmatmul.mubr.f32.gmra.mxu0 %v1287
    %v1289 = vpop.f32.mrf.mxu0
    %v1290 = vadd.f32 %v1214, %v1289
    %v1291 = vpop.f32.mrf.mxu0
    %1292 = vdwg.mxu0
    %1293 = vmatprep.subr.mxu0 0.0
    %1294 = vmatpush1.msra.mxu0 0.0
    %1295 = vmatprep.subr.mxu0 0.0
    %1296 = vmatpush1.msra.mxu0 0.0
    %1297 = vmatprep.subr.mxu0 0.0
    %1298 = vmatpush1.msra.mxu0 0.0
    %1299 = vmatprep.subr.mxu0 0.0
    %1300 = vmatpush1.msra.mxu0 0.0
    %1301 = vmatprep.subr.mxu0 0.0
    %1302 = vmatpush1.msra.mxu0 0.0
    %1303 = vmatprep.subr.mxu0 0.0
    %1304 = vmatpush1.msra.mxu0 0.0
    %1305 = vmatprep.subr.mxu0 0.0
    %1306 = vmatpush1.msra.mxu0 0.0
    %1307 = vmatprep.subr.mxu0 0.0
    %1308 = vmatpush1.msra.mxu0 0.0
    %1309 = vmatprep.subr.mxu0 0.0
    %1310 = vmatpush1.msra.mxu0 0.0
    %1311 = vmatprep.subr.mxu0 0.0
    %1312 = vmatpush1.msra.mxu0 0.0
    %1313 = vmatprep.subr.mxu0 0.0
    %1314 = vmatpush1.msra.mxu0 0.0
    %1315 = vmatprep.subr.mxu0 0.0
    %1316 = vmatpush1.msra.mxu0 0.0
    %1317 = vmatprep.subr.mxu0 0.0
    %1318 = vmatpush1.msra.mxu0 0.0
    %1319 = vmatprep.subr.mxu0 0.0
    %1320 = vmatpush1.msra.mxu0 0.0
    %1321 = vmatprep.subr.mxu0 0.0
    %v1322 = vand.u32 %v1054, 4294901760
    %1323 = vmatpush1.msra.mxu0 %v1322
    %1324 = vmatprep.subr.mxu0 0.0
    %v1325 = vand.u32 %v1053, 4294901760
    %1326 = vmatpush1.msra.mxu0 %v1325
    %1327 = vmatprep.subr.mxu0 0.0
    %1328 = vmatpush2.msra.mxu0 0.0
    %1329 = vmatprep.subr.mxu0 0.0
    %1330 = vmatpush2.msra.mxu0 0.0
    %1331 = vmatprep.subr.mxu0 0.0
    %1332 = vmatpush2.msra.mxu0 0.0
    %1333 = vmatprep.subr.mxu0 0.0
    %1334 = vmatpush2.msra.mxu0 0.0
    %1335 = vmatprep.subr.mxu0 0.0
    %1336 = vmatpush2.msra.mxu0 0.0
    %1337 = vmatprep.subr.mxu0 0.0
    %1338 = vmatpush2.msra.mxu0 0.0
    %1339 = vmatprep.subr.mxu0 0.0
    %1340 = vmatpush2.msra.mxu0 0.0
    %1341 = vmatprep.subr.mxu0 0.0
    %1342 = vmatpush2.msra.mxu0 0.0
    %1343 = vmatprep.subr.mxu0 0.0
    %1344 = vmatpush2.msra.mxu0 0.0
    %1345 = vmatprep.subr.mxu0 0.0
    %1346 = vmatpush2.msra.mxu0 0.0
    %1347 = vmatprep.subr.mxu0 0.0
    %1348 = vmatpush2.msra.mxu0 0.0
    %1349 = vmatprep.subr.mxu0 0.0
    %1350 = vmatpush2.msra.mxu0 0.0
    %1351 = vmatprep.subr.mxu0 0.0
    %1352 = vmatpush2.msra.mxu0 0.0
    %1353 = vmatprep.subr.mxu0 0.0
    %1354 = vmatpush2.msra.mxu0 0.0
    %1355 = vmatprep.subr.mxu0 0.0
    %1356 = vmatpush2.msra.mxu0 0.0
    %1357 = vmatprep.subr.mxu0 0.0
    %1358 = vmatpush2.msra.mxu0 0.0
    %1359 = vmatprep.mubr.f32.mxu0 0.0
    %v1360 = vand.u32 %v1057, 4294901760
    %v1361 = vsub.f32 %v1057, %v1360
    %v1362 = vand.u32 %v1361, 4294901760
    %1363 = vmatmul.mubr.f32.gmra.mxu0 %v1362
    %v1364 = vpop.f32.mrf.mxu0
    %v1365 = vadd.f32 %v1290, %v1364
    %v1366 = vpop.f32.mrf.mxu0
    %1367 = vdwg.mxu0
    %1368 = vmatprep.subr.mxu0 0.0
    %1369 = vmatpush1.msra.mxu0 0.0
    %1370 = vmatprep.subr.mxu0 0.0
    %1371 = vmatpush1.msra.mxu0 0.0
    %1372 = vmatprep.subr.mxu0 0.0
    %1373 = vmatpush1.msra.mxu0 0.0
    %1374 = vmatprep.subr.mxu0 0.0
    %1375 = vmatpush1.msra.mxu0 0.0
    %1376 = vmatprep.subr.mxu0 0.0
    %1377 = vmatpush1.msra.mxu0 0.0
    %1378 = vmatprep.subr.mxu0 0.0
    %1379 = vmatpush1.msra.mxu0 0.0
    %1380 = vmatprep.subr.mxu0 0.0
    %1381 = vmatpush1.msra.mxu0 0.0
    %1382 = vmatprep.subr.mxu0 0.0
    %1383 = vmatpush1.msra.mxu0 0.0
    %1384 = vmatprep.subr.mxu0 0.0
    %1385 = vmatpush1.msra.mxu0 0.0
    %1386 = vmatprep.subr.mxu0 0.0
    %1387 = vmatpush1.msra.mxu0 0.0
    %1388 = vmatprep.subr.mxu0 0.0
    %1389 = vmatpush1.msra.mxu0 0.0
    %1390 = vmatprep.subr.mxu0 0.0
    %1391 = vmatpush1.msra.mxu0 0.0
    %1392 = vmatprep.subr.mxu0 0.0
    %1393 = vmatpush1.msra.mxu0 0.0
    %1394 = vmatprep.subr.mxu0 0.0
    %1395 = vmatpush1.msra.mxu0 0.0
    %1396 = vmatprep.subr.mxu0 0.0
    %v1397 = vand.u32 %v1054, 4294901760
    %v1398 = vsub.f32 %v1054, %v1397
    %v1399 = vand.u32 %v1398, 4294901760
    %1400 = vmatpush1.msra.mxu0 %v1399
    %1401 = vmatprep.subr.mxu0 0.0
    %v1402 = vand.u32 %v1053, 4294901760
    %v1403 = vsub.f32 %v1053, %v1402
    %v1404 = vand.u32 %v1403, 4294901760
    %1405 = vmatpush1.msra.mxu0 %v1404
    %1406 = vmatprep.subr.mxu0 0.0
    %1407 = vmatpush2.msra.mxu0 0.0
    %1408 = vmatprep.subr.mxu0 0.0
    %1409 = vmatpush2.msra.mxu0 0.0
    %1410 = vmatprep.subr.mxu0 0.0
    %1411 = vmatpush2.msra.mxu0 0.0
    %1412 = vmatprep.subr.mxu0 0.0
    %1413 = vmatpush2.msra.mxu0 0.0
    %1414 = vmatprep.subr.mxu0 0.0
    %1415 = vmatpush2.msra.mxu0 0.0
    %1416 = vmatprep.subr.mxu0 0.0
    %1417 = vmatpush2.msra.mxu0 0.0
    %1418 = vmatprep.subr.mxu0 0.0
    %1419 = vmatpush2.msra.mxu0 0.0
    %1420 = vmatprep.subr.mxu0 0.0
    %1421 = vmatpush2.msra.mxu0 0.0
    %1422 = vmatprep.subr.mxu0 0.0
    %1423 = vmatpush2.msra.mxu0 0.0
    %1424 = vmatprep.subr.mxu0 0.0
    %1425 = vmatpush2.msra.mxu0 0.0
    %1426 = vmatprep.subr.mxu0 0.0
    %1427 = vmatpush2.msra.mxu0 0.0
    %1428 = vmatprep.subr.mxu0 0.0
    %1429 = vmatpush2.msra.mxu0 0.0
    %1430 = vmatprep.subr.mxu0 0.0
    %1431 = vmatpush2.msra.mxu0 0.0
    %1432 = vmatprep.subr.mxu0 0.0
    %1433 = vmatpush2.msra.mxu0 0.0
    %1434 = vmatprep.subr.mxu0 0.0
    %1435 = vmatpush2.msra.mxu0 0.0
    %1436 = vmatprep.subr.mxu0 0.0
    %1437 = vmatpush2.msra.mxu0 0.0
    %1438 = vmatprep.mubr.f32.mxu0 0.0
    %v1439 = vand.u32 %v1057, 4294901760
    %1440 = vmatmul.mubr.f32.gmra.mxu0 %v1439
    %v1441 = vpop.f32.mrf.mxu0
    %v1442 = vadd.f32 %v1365, %v1441
    %v1443 = vpop.f32.mrf.mxu0
    %1444 = vdwg.mxu0
    %1445 = vmatprep.subr.mxu0 0.0
    %1446 = vmatpush1.msra.mxu0 0.0
    %1447 = vmatprep.subr.mxu0 0.0
    %1448 = vmatpush1.msra.mxu0 0.0
    %1449 = vmatprep.subr.mxu0 0.0
    %1450 = vmatpush1.msra.mxu0 0.0
    %1451 = vmatprep.subr.mxu0 0.0
    %1452 = vmatpush1.msra.mxu0 0.0
    %1453 = vmatprep.subr.mxu0 0.0
    %1454 = vmatpush1.msra.mxu0 0.0
    %1455 = vmatprep.subr.mxu0 0.0
    %1456 = vmatpush1.msra.mxu0 0.0
    %1457 = vmatprep.subr.mxu0 0.0
    %1458 = vmatpush1.msra.mxu0 0.0
    %1459 = vmatprep.subr.mxu0 0.0
    %1460 = vmatpush1.msra.mxu0 0.0
    %1461 = vmatprep.subr.mxu0 0.0
    %1462 = vmatpush1.msra.mxu0 0.0
    %1463 = vmatprep.subr.mxu0 0.0
    %1464 = vmatpush1.msra.mxu0 0.0
    %1465 = vmatprep.subr.mxu0 0.0
    %1466 = vmatpush1.msra.mxu0 0.0
    %1467 = vmatprep.subr.mxu0 0.0
    %1468 = vmatpush1.msra.mxu0 0.0
    %1469 = vmatprep.subr.mxu0 0.0
    %1470 = vmatpush1.msra.mxu0 0.0
    %1471 = vmatprep.subr.mxu0 0.0
    %1472 = vmatpush1.msra.mxu0 0.0
    %1473 = vmatprep.subr.mxu0 0.0
    %v1474 = vand.u32 %v1054, 4294901760
    %1475 = vmatpush1.msra.mxu0 %v1474
    %1476 = vmatprep.subr.mxu0 0.0
    %v1477 = vand.u32 %v1053, 4294901760
    %1478 = vmatpush1.msra.mxu0 %v1477
    %1479 = vmatprep.subr.mxu0 0.0
    %1480 = vmatpush2.msra.mxu0 0.0
    %1481 = vmatprep.subr.mxu0 0.0
    %1482 = vmatpush2.msra.mxu0 0.0
    %1483 = vmatprep.subr.mxu0 0.0
    %1484 = vmatpush2.msra.mxu0 0.0
    %1485 = vmatprep.subr.mxu0 0.0
    %1486 = vmatpush2.msra.mxu0 0.0
    %1487 = vmatprep.subr.mxu0 0.0
    %1488 = vmatpush2.msra.mxu0 0.0
    %1489 = vmatprep.subr.mxu0 0.0
    %1490 = vmatpush2.msra.mxu0 0.0
    %1491 = vmatprep.subr.mxu0 0.0
    %1492 = vmatpush2.msra.mxu0 0.0
    %1493 = vmatprep.subr.mxu0 0.0
    %1494 = vmatpush2.msra.mxu0 0.0
    %1495 = vmatprep.subr.mxu0 0.0
    %1496 = vmatpush2.msra.mxu0 0.0
    %1497 = vmatprep.subr.mxu0 0.0
    %1498 = vmatpush2.msra.mxu0 0.0
    %1499 = vmatprep.subr.mxu0 0.0
    %1500 = vmatpush2.msra.mxu0 0.0
    %1501 = vmatprep.subr.mxu0 0.0
    %1502 = vmatpush2.msra.mxu0 0.0
    %1503 = vmatprep.subr.mxu0 0.0
    %1504 = vmatpush2.msra.mxu0 0.0
    %1505 = vmatprep.subr.mxu0 0.0
    %1506 = vmatpush2.msra.mxu0 0.0
    %1507 = vmatprep.subr.mxu0 0.0
    %1508 = vmatpush2.msra.mxu0 0.0
    %1509 = vmatprep.subr.mxu0 0.0
    %1510 = vmatpush2.msra.mxu0 0.0
    %1511 = vmatprep.mubr.f32.mxu0 0.0
    %v1512 = vand.u32 %v1057, 4294901760
    %1513 = vmatmul.mubr.f32.gmra.mxu0 %v1512
    %v1514 = vpop.f32.mrf.mxu0
    %v1515 = vadd.f32 %v1442, %v1514
    %v1516 = vpop.f32.mrf.mxu0
    %1517 = vdwg.mxu0
    %v1518 = vadd.f32 %v1515, %v1047
    %1520 = vrot.lane.b32.xlu0 %v1518, 16
    %v1521 = vpop.permute.xlu0 %1520
    %v1523 = vrcp.pop %v1521
    %v1524 = vmul.f32 %v577, %v1523
    %1525 = vrot.lane.b32.xlu0 %v1051, 16
    %v1526 = vpop.permute.xlu0 %1525
    %v1528 = vmul.f32 %v1524, %v1526
    %s1529 = scalar_lea.vmem [#allocation9], 32
    %v1530 = vld [vmem:[%s1529] sm:$0xff]
    %v1531 = vld [vmem:[%s1529 + $0x8] sm:$0xff]
    %v1532 = vmul.f32 %v582, %v1528
    %1534 = vrot.lane.b32.xlu0 %v1528, 112
    %v1535 = vpop.permute.xlu0 %1534
    %1537 = vrot.lane.b32.xlu0 %v1532, 112
    %v1538 = vpop.permute.xlu0 %1537
    %v1540 = vsel %vm584, %v1535, 0
    %1542 = vmatprep.subr.mxu0 0.0
    %1543 = vmatpush1.msra.mxu0 0.0
    %1544 = vmatprep.subr.mxu0 0.0
    %1545 = vmatpush1.msra.mxu0 0.0
    %1546 = vmatprep.subr.mxu0 0.0
    %1547 = vmatpush1.msra.mxu0 0.0
    %1548 = vmatprep.subr.mxu0 0.0
    %1549 = vmatpush1.msra.mxu0 0.0
    %1550 = vmatprep.subr.mxu0 0.0
    %1551 = vmatpush1.msra.mxu0 0.0
    %1552 = vmatprep.subr.mxu0 0.0
    %1553 = vmatpush1.msra.mxu0 0.0
    %1554 = vmatprep.subr.mxu0 0.0
    %1555 = vmatpush1.msra.mxu0 0.0
    %1556 = vmatprep.subr.mxu0 0.0
    %1557 = vmatpush1.msra.mxu0 0.0
    %1558 = vmatprep.subr.mxu0 0.0
    %1559 = vmatpush1.msra.mxu0 0.0
    %1560 = vmatprep.subr.mxu0 0.0
    %1561 = vmatpush1.msra.mxu0 0.0
    %1562 = vmatprep.subr.mxu0 0.0
    %1563 = vmatpush1.msra.mxu0 0.0
    %1564 = vmatprep.subr.mxu0 0.0
    %1565 = vmatpush1.msra.mxu0 0.0
    %1566 = vmatprep.subr.mxu0 0.0
    %1567 = vmatpush1.msra.mxu0 0.0
    %1568 = vmatprep.subr.mxu0 0.0
    %1569 = vmatpush1.msra.mxu0 0.0
    %1570 = vmatprep.subr.mxu0 0.0
    %v1571 = vand.u32 %v1531, 4294901760
    %1572 = vmatpush1.msra.mxu0 %v1571
    %1573 = vmatprep.subr.mxu0 0.0
    %v1574 = vand.u32 %v1530, 4294901760
    %1575 = vmatpush1.msra.mxu0 %v1574
    %1576 = vmatprep.subr.mxu0 0.0
    %1577 = vmatpush2.msra.mxu0 0.0
    %1578 = vmatprep.subr.mxu0 0.0
    %1579 = vmatpush2.msra.mxu0 0.0
    %1580 = vmatprep.subr.mxu0 0.0
    %1581 = vmatpush2.msra.mxu0 0.0
    %1582 = vmatprep.subr.mxu0 0.0
    %1583 = vmatpush2.msra.mxu0 0.0
    %1584 = vmatprep.subr.mxu0 0.0
    %1585 = vmatpush2.msra.mxu0 0.0
    %1586 = vmatprep.subr.mxu0 0.0
    %1587 = vmatpush2.msra.mxu0 0.0
    %1588 = vmatprep.subr.mxu0 0.0
    %1589 = vmatpush2.msra.mxu0 0.0
    %1590 = vmatprep.subr.mxu0 0.0
    %1591 = vmatpush2.msra.mxu0 0.0
    %1592 = vmatprep.subr.mxu0 0.0
    %1593 = vmatpush2.msra.mxu0 0.0
    %1594 = vmatprep.subr.mxu0 0.0
    %1595 = vmatpush2.msra.mxu0 0.0
    %1596 = vmatprep.subr.mxu0 0.0
    %1597 = vmatpush2.msra.mxu0 0.0
    %1598 = vmatprep.subr.mxu0 0.0
    %1599 = vmatpush2.msra.mxu0 0.0
    %1600 = vmatprep.subr.mxu0 0.0
    %1601 = vmatpush2.msra.mxu0 0.0
    %1602 = vmatprep.subr.mxu0 0.0
    %1603 = vmatpush2.msra.mxu0 0.0
    %1604 = vmatprep.subr.mxu0 0.0
    %1605 = vmatpush2.msra.mxu0 0.0
    %1606 = vmatprep.subr.mxu0 0.0
    %1607 = vmatpush2.msra.mxu0 0.0
    %1608 = vmatprep.mubr.f32.mxu0 0.0
    %v1609 = vand.u32 %v1540, 4294901760
    %v1610 = vsub.f32 %v1540, %v1609
    %v1611 = vand.u32 %v1610, 4294901760
    %v1612 = vsub.f32 %v1610, %v1611
    %v1613 = vand.u32 %v1612, 4294901760
    %1614 = vmatmul.mubr.f32.gmra.mxu0 %v1613
    %v1615 = vpop.f32.mrf.mxu0
    %v1616 = vadd.f32 %v1538, %v1615
    %v1617 = vpop.f32.mrf.mxu0
    %1618 = vdwg.mxu0
    %1619 = vmatprep.subr.mxu0 0.0
    %1620 = vmatpush1.msra.mxu0 0.0
    %1621 = vmatprep.subr.mxu0 0.0
    %1622 = vmatpush1.msra.mxu0 0.0
    %1623 = vmatprep.subr.mxu0 0.0
    %1624 = vmatpush1.msra.mxu0 0.0
    %1625 = vmatprep.subr.mxu0 0.0
    %1626 = vmatpush1.msra.mxu0 0.0
    %1627 = vmatprep.subr.mxu0 0.0
    %1628 = vmatpush1.msra.mxu0 0.0
    %1629 = vmatprep.subr.mxu0 0.0
    %1630 = vmatpush1.msra.mxu0 0.0
    %1631 = vmatprep.subr.mxu0 0.0
    %1632 = vmatpush1.msra.mxu0 0.0
    %1633 = vmatprep.subr.mxu0 0.0
    %1634 = vmatpush1.msra.mxu0 0.0
    %1635 = vmatprep.subr.mxu0 0.0
    %1636 = vmatpush1.msra.mxu0 0.0
    %1637 = vmatprep.subr.mxu0 0.0
    %1638 = vmatpush1.msra.mxu0 0.0
    %1639 = vmatprep.subr.mxu0 0.0
    %1640 = vmatpush1.msra.mxu0 0.0
    %1641 = vmatprep.subr.mxu0 0.0
    %1642 = vmatpush1.msra.mxu0 0.0
    %1643 = vmatprep.subr.mxu0 0.0
    %1644 = vmatpush1.msra.mxu0 0.0
    %1645 = vmatprep.subr.mxu0 0.0
    %1646 = vmatpush1.msra.mxu0 0.0
    %1647 = vmatprep.subr.mxu0 0.0
    %v1648 = vand.u32 %v1531, 4294901760
    %v1649 = vsub.f32 %v1531, %v1648
    %v1650 = vand.u32 %v1649, 4294901760
    %v1651 = vsub.f32 %v1649, %v1650
    %v1652 = vand.u32 %v1651, 4294901760
    %1653 = vmatpush1.msra.mxu0 %v1652
    %1654 = vmatprep.subr.mxu0 0.0
    %v1655 = vand.u32 %v1530, 4294901760
    %v1656 = vsub.f32 %v1530, %v1655
    %v1657 = vand.u32 %v1656, 4294901760
    %v1658 = vsub.f32 %v1656, %v1657
    %v1659 = vand.u32 %v1658, 4294901760
    %1660 = vmatpush1.msra.mxu0 %v1659
    %1661 = vmatprep.subr.mxu0 0.0
    %1662 = vmatpush2.msra.mxu0 0.0
    %1663 = vmatprep.subr.mxu0 0.0
    %1664 = vmatpush2.msra.mxu0 0.0
    %1665 = vmatprep.subr.mxu0 0.0
    %1666 = vmatpush2.msra.mxu0 0.0
    %1667 = vmatprep.subr.mxu0 0.0
    %1668 = vmatpush2.msra.mxu0 0.0
    %1669 = vmatprep.subr.mxu0 0.0
    %1670 = vmatpush2.msra.mxu0 0.0
    %1671 = vmatprep.subr.mxu0 0.0
    %1672 = vmatpush2.msra.mxu0 0.0
    %1673 = vmatprep.subr.mxu0 0.0
    %1674 = vmatpush2.msra.mxu0 0.0
    %1675 = vmatprep.subr.mxu0 0.0
    %1676 = vmatpush2.msra.mxu0 0.0
    %1677 = vmatprep.subr.mxu0 0.0
    %1678 = vmatpush2.msra.mxu0 0.0
    %1679 = vmatprep.subr.mxu0 0.0
    %1680 = vmatpush2.msra.mxu0 0.0
    %1681 = vmatprep.subr.mxu0 0.0
    %1682 = vmatpush2.msra.mxu0 0.0
    %1683 = vmatprep.subr.mxu0 0.0
    %1684 = vmatpush2.msra.mxu0 0.0
    %1685 = vmatprep.subr.mxu0 0.0
    %1686 = vmatpush2.msra.mxu0 0.0
    %1687 = vmatprep.subr.mxu0 0.0
    %1688 = vmatpush2.msra.mxu0 0.0
    %1689 = vmatprep.subr.mxu0 0.0
    %1690 = vmatpush2.msra.mxu0 0.0
    %1691 = vmatprep.subr.mxu0 0.0
    %1692 = vmatpush2.msra.mxu0 0.0
    %1693 = vmatprep.mubr.f32.mxu0 0.0
    %v1694 = vand.u32 %v1540, 4294901760
    %1695 = vmatmul.mubr.f32.gmra.mxu0 %v1694
    %v1696 = vpop.f32.mrf.mxu0
    %v1697 = vadd.f32 %v1616, %v1696
    %v1698 = vpop.f32.mrf.mxu0
    %1699 = vdwg.mxu0
    %1700 = vmatprep.subr.mxu0 0.0
    %1701 = vmatpush1.msra.mxu0 0.0
    %1702 = vmatprep.subr.mxu0 0.0
    %1703 = vmatpush1.msra.mxu0 0.0
    %1704 = vmatprep.subr.mxu0 0.0
    %1705 = vmatpush1.msra.mxu0 0.0
    %1706 = vmatprep.subr.mxu0 0.0
    %1707 = vmatpush1.msra.mxu0 0.0
    %1708 = vmatprep.subr.mxu0 0.0
    %1709 = vmatpush1.msra.mxu0 0.0
    %1710 = vmatprep.subr.mxu0 0.0
    %1711 = vmatpush1.msra.mxu0 0.0
    %1712 = vmatprep.subr.mxu0 0.0
    %1713 = vmatpush1.msra.mxu0 0.0
    %1714 = vmatprep.subr.mxu0 0.0
    %1715 = vmatpush1.msra.mxu0 0.0
    %1716 = vmatprep.subr.mxu0 0.0
    %1717 = vmatpush1.msra.mxu0 0.0
    %1718 = vmatprep.subr.mxu0 0.0
    %1719 = vmatpush1.msra.mxu0 0.0
    %1720 = vmatprep.subr.mxu0 0.0
    %1721 = vmatpush1.msra.mxu0 0.0
    %1722 = vmatprep.subr.mxu0 0.0
    %1723 = vmatpush1.msra.mxu0 0.0
    %1724 = vmatprep.subr.mxu0 0.0
    %1725 = vmatpush1.msra.mxu0 0.0
    %1726 = vmatprep.subr.mxu0 0.0
    %1727 = vmatpush1.msra.mxu0 0.0
    %1728 = vmatprep.subr.mxu0 0.0
    %v1729 = vand.u32 %v1531, 4294901760
    %v1730 = vsub.f32 %v1531, %v1729
    %1731 = vmatpush1.msra.mxu0 %v1730
    %1732 = vmatprep.subr.mxu0 0.0
    %v1733 = vand.u32 %v1530, 4294901760
    %v1734 = vsub.f32 %v1530, %v1733
    %1735 = vmatpush1.msra.mxu0 %v1734
    %1736 = vmatprep.subr.mxu0 0.0
    %1737 = vmatpush2.msra.mxu0 0.0
    %1738 = vmatprep.subr.mxu0 0.0
    %1739 = vmatpush2.msra.mxu0 0.0
    %1740 = vmatprep.subr.mxu0 0.0
    %1741 = vmatpush2.msra.mxu0 0.0
    %1742 = vmatprep.subr.mxu0 0.0
    %1743 = vmatpush2.msra.mxu0 0.0
    %1744 = vmatprep.subr.mxu0 0.0
    %1745 = vmatpush2.msra.mxu0 0.0
    %1746 = vmatprep.subr.mxu0 0.0
    %1747 = vmatpush2.msra.mxu0 0.0
    %1748 = vmatprep.subr.mxu0 0.0
    %1749 = vmatpush2.msra.mxu0 0.0
    %1750 = vmatprep.subr.mxu0 0.0
    %1751 = vmatpush2.msra.mxu0 0.0
    %1752 = vmatprep.subr.mxu0 0.0
    %1753 = vmatpush2.msra.mxu0 0.0
    %1754 = vmatprep.subr.mxu0 0.0
    %1755 = vmatpush2.msra.mxu0 0.0
    %1756 = vmatprep.subr.mxu0 0.0
    %1757 = vmatpush2.msra.mxu0 0.0
    %1758 = vmatprep.subr.mxu0 0.0
    %1759 = vmatpush2.msra.mxu0 0.0
    %1760 = vmatprep.subr.mxu0 0.0
    %1761 = vmatpush2.msra.mxu0 0.0
    %1762 = vmatprep.subr.mxu0 0.0
    %1763 = vmatpush2.msra.mxu0 0.0
    %1764 = vmatprep.subr.mxu0 0.0
    %1765 = vmatpush2.msra.mxu0 0.0
    %1766 = vmatprep.subr.mxu0 0.0
    %1767 = vmatpush2.msra.mxu0 0.0
    %1768 = vmatprep.mubr.f32.mxu0 0.0
    %v1769 = vand.u32 %v1540, 4294901760
    %v1770 = vsub.f32 %v1540, %v1769
    %1771 = vmatmul.mubr.f32.gmra.mxu0 %v1770
    %v1772 = vpop.f32.mrf.mxu0
    %v1773 = vadd.f32 %v1697, %v1772
    %v1774 = vpop.f32.mrf.mxu0
    %1775 = vdwg.mxu0
    %1776 = vmatprep.subr.mxu0 0.0
    %1777 = vmatpush1.msra.mxu0 0.0
    %1778 = vmatprep.subr.mxu0 0.0
    %1779 = vmatpush1.msra.mxu0 0.0
    %1780 = vmatprep.subr.mxu0 0.0
    %1781 = vmatpush1.msra.mxu0 0.0
    %1782 = vmatprep.subr.mxu0 0.0
    %1783 = vmatpush1.msra.mxu0 0.0
    %1784 = vmatprep.subr.mxu0 0.0
    %1785 = vmatpush1.msra.mxu0 0.0
    %1786 = vmatprep.subr.mxu0 0.0
    %1787 = vmatpush1.msra.mxu0 0.0
    %1788 = vmatprep.subr.mxu0 0.0
    %1789 = vmatpush1.msra.mxu0 0.0
    %1790 = vmatprep.subr.mxu0 0.0
    %1791 = vmatpush1.msra.mxu0 0.0
    %1792 = vmatprep.subr.mxu0 0.0
    %1793 = vmatpush1.msra.mxu0 0.0
    %1794 = vmatprep.subr.mxu0 0.0
    %1795 = vmatpush1.msra.mxu0 0.0
    %1796 = vmatprep.subr.mxu0 0.0
    %1797 = vmatpush1.msra.mxu0 0.0
    %1798 = vmatprep.subr.mxu0 0.0
    %1799 = vmatpush1.msra.mxu0 0.0
    %1800 = vmatprep.subr.mxu0 0.0
    %1801 = vmatpush1.msra.mxu0 0.0
    %1802 = vmatprep.subr.mxu0 0.0
    %1803 = vmatpush1.msra.mxu0 0.0
    %1804 = vmatprep.subr.mxu0 0.0
    %v1805 = vand.u32 %v1531, 4294901760
    %1806 = vmatpush1.msra.mxu0 %v1805
    %1807 = vmatprep.subr.mxu0 0.0
    %v1808 = vand.u32 %v1530, 4294901760
    %1809 = vmatpush1.msra.mxu0 %v1808
    %1810 = vmatprep.subr.mxu0 0.0
    %1811 = vmatpush2.msra.mxu0 0.0
    %1812 = vmatprep.subr.mxu0 0.0
    %1813 = vmatpush2.msra.mxu0 0.0
    %1814 = vmatprep.subr.mxu0 0.0
    %1815 = vmatpush2.msra.mxu0 0.0
    %1816 = vmatprep.subr.mxu0 0.0
    %1817 = vmatpush2.msra.mxu0 0.0
    %1818 = vmatprep.subr.mxu0 0.0
    %1819 = vmatpush2.msra.mxu0 0.0
    %1820 = vmatprep.subr.mxu0 0.0
    %1821 = vmatpush2.msra.mxu0 0.0
    %1822 = vmatprep.subr.mxu0 0.0
    %1823 = vmatpush2.msra.mxu0 0.0
    %1824 = vmatprep.subr.mxu0 0.0
    %1825 = vmatpush2.msra.mxu0 0.0
    %1826 = vmatprep.subr.mxu0 0.0
    %1827 = vmatpush2.msra.mxu0 0.0
    %1828 = vmatprep.subr.mxu0 0.0
    %1829 = vmatpush2.msra.mxu0 0.0
    %1830 = vmatprep.subr.mxu0 0.0
    %1831 = vmatpush2.msra.mxu0 0.0
    %1832 = vmatprep.subr.mxu0 0.0
    %1833 = vmatpush2.msra.mxu0 0.0
    %1834 = vmatprep.subr.mxu0 0.0
    %1835 = vmatpush2.msra.mxu0 0.0
    %1836 = vmatprep.subr.mxu0 0.0
    %1837 = vmatpush2.msra.mxu0 0.0
    %1838 = vmatprep.subr.mxu0 0.0
    %1839 = vmatpush2.msra.mxu0 0.0
    %1840 = vmatprep.subr.mxu0 0.0
    %1841 = vmatpush2.msra.mxu0 0.0
    %1842 = vmatprep.mubr.f32.mxu0 0.0
    %v1843 = vand.u32 %v1540, 4294901760
    %v1844 = vsub.f32 %v1540, %v1843
    %v1845 = vand.u32 %v1844, 4294901760
    %1846 = vmatmul.mubr.f32.gmra.mxu0 %v1845
    %v1847 = vpop.f32.mrf.mxu0
    %v1848 = vadd.f32 %v1773, %v1847
    %v1849 = vpop.f32.mrf.mxu0
    %1850 = vdwg.mxu0
    %1851 = vmatprep.subr.mxu0 0.0
    %1852 = vmatpush1.msra.mxu0 0.0
    %1853 = vmatprep.subr.mxu0 0.0
    %1854 = vmatpush1.msra.mxu0 0.0
    %1855 = vmatprep.subr.mxu0 0.0
    %1856 = vmatpush1.msra.mxu0 0.0
    %1857 = vmatprep.subr.mxu0 0.0
    %1858 = vmatpush1.msra.mxu0 0.0
    %1859 = vmatprep.subr.mxu0 0.0
    %1860 = vmatpush1.msra.mxu0 0.0
    %1861 = vmatprep.subr.mxu0 0.0
    %1862 = vmatpush1.msra.mxu0 0.0
    %1863 = vmatprep.subr.mxu0 0.0
    %1864 = vmatpush1.msra.mxu0 0.0
    %1865 = vmatprep.subr.mxu0 0.0
    %1866 = vmatpush1.msra.mxu0 0.0
    %1867 = vmatprep.subr.mxu0 0.0
    %1868 = vmatpush1.msra.mxu0 0.0
    %1869 = vmatprep.subr.mxu0 0.0
    %1870 = vmatpush1.msra.mxu0 0.0
    %1871 = vmatprep.subr.mxu0 0.0
    %1872 = vmatpush1.msra.mxu0 0.0
    %1873 = vmatprep.subr.mxu0 0.0
    %1874 = vmatpush1.msra.mxu0 0.0
    %1875 = vmatprep.subr.mxu0 0.0
    %1876 = vmatpush1.msra.mxu0 0.0
    %1877 = vmatprep.subr.mxu0 0.0
    %1878 = vmatpush1.msra.mxu0 0.0
    %1879 = vmatprep.subr.mxu0 0.0
    %v1880 = vand.u32 %v1531, 4294901760
    %v1881 = vsub.f32 %v1531, %v1880
    %v1882 = vand.u32 %v1881, 4294901760
    %1883 = vmatpush1.msra.mxu0 %v1882
    %1884 = vmatprep.subr.mxu0 0.0
    %v1885 = vand.u32 %v1530, 4294901760
    %v1886 = vsub.f32 %v1530, %v1885
    %v1887 = vand.u32 %v1886, 4294901760
    %1888 = vmatpush1.msra.mxu0 %v1887
    %1889 = vmatprep.subr.mxu0 0.0
    %1890 = vmatpush2.msra.mxu0 0.0
    %1891 = vmatprep.subr.mxu0 0.0
    %1892 = vmatpush2.msra.mxu0 0.0
    %1893 = vmatprep.subr.mxu0 0.0
    %1894 = vmatpush2.msra.mxu0 0.0
    %1895 = vmatprep.subr.mxu0 0.0
    %1896 = vmatpush2.msra.mxu0 0.0
    %1897 = vmatprep.subr.mxu0 0.0
    %1898 = vmatpush2.msra.mxu0 0.0
    %1899 = vmatprep.subr.mxu0 0.0
    %1900 = vmatpush2.msra.mxu0 0.0
    %1901 = vmatprep.subr.mxu0 0.0
    %1902 = vmatpush2.msra.mxu0 0.0
    %1903 = vmatprep.subr.mxu0 0.0
    %1904 = vmatpush2.msra.mxu0 0.0
    %1905 = vmatprep.subr.mxu0 0.0
    %1906 = vmatpush2.msra.mxu0 0.0
    %1907 = vmatprep.subr.mxu0 0.0
    %1908 = vmatpush2.msra.mxu0 0.0
    %1909 = vmatprep.subr.mxu0 0.0
    %1910 = vmatpush2.msra.mxu0 0.0
    %1911 = vmatprep.subr.mxu0 0.0
    %1912 = vmatpush2.msra.mxu0 0.0
    %1913 = vmatprep.subr.mxu0 0.0
    %1914 = vmatpush2.msra.mxu0 0.0
    %1915 = vmatprep.subr.mxu0 0.0
    %1916 = vmatpush2.msra.mxu0 0.0
    %1917 = vmatprep.subr.mxu0 0.0
    %1918 = vmatpush2.msra.mxu0 0.0
    %1919 = vmatprep.subr.mxu0 0.0
    %1920 = vmatpush2.msra.mxu0 0.0
    %1921 = vmatprep.mubr.f32.mxu0 0.0
    %v1922 = vand.u32 %v1540, 4294901760
    %1923 = vmatmul.mubr.f32.gmra.mxu0 %v1922
    %v1924 = vpop.f32.mrf.mxu0
    %v1925 = vadd.f32 %v1848, %v1924
    %v1926 = vpop.f32.mrf.mxu0
    %1927 = vdwg.mxu0
    %1928 = vmatprep.subr.mxu0 0.0
    %1929 = vmatpush1.msra.mxu0 0.0
    %1930 = vmatprep.subr.mxu0 0.0
    %1931 = vmatpush1.msra.mxu0 0.0
    %1932 = vmatprep.subr.mxu0 0.0
    %1933 = vmatpush1.msra.mxu0 0.0
    %1934 = vmatprep.subr.mxu0 0.0
    %1935 = vmatpush1.msra.mxu0 0.0
    %1936 = vmatprep.subr.mxu0 0.0
    %1937 = vmatpush1.msra.mxu0 0.0
    %1938 = vmatprep.subr.mxu0 0.0
    %1939 = vmatpush1.msra.mxu0 0.0
    %1940 = vmatprep.subr.mxu0 0.0
    %1941 = vmatpush1.msra.mxu0 0.0
    %1942 = vmatprep.subr.mxu0 0.0
    %1943 = vmatpush1.msra.mxu0 0.0
    %1944 = vmatprep.subr.mxu0 0.0
    %1945 = vmatpush1.msra.mxu0 0.0
    %1946 = vmatprep.subr.mxu0 0.0
    %1947 = vmatpush1.msra.mxu0 0.0
    %1948 = vmatprep.subr.mxu0 0.0
    %1949 = vmatpush1.msra.mxu0 0.0
    %1950 = vmatprep.subr.mxu0 0.0
    %1951 = vmatpush1.msra.mxu0 0.0
    %1952 = vmatprep.subr.mxu0 0.0
    %1953 = vmatpush1.msra.mxu0 0.0
    %1954 = vmatprep.subr.mxu0 0.0
    %1955 = vmatpush1.msra.mxu0 0.0
    %1956 = vmatprep.subr.mxu0 0.0
    %v1957 = vand.u32 %v1531, 4294901760
    %1958 = vmatpush1.msra.mxu0 %v1957
    %1959 = vmatprep.subr.mxu0 0.0
    %v1960 = vand.u32 %v1530, 4294901760
    %1961 = vmatpush1.msra.mxu0 %v1960
    %1962 = vmatprep.subr.mxu0 0.0
    %1963 = vmatpush2.msra.mxu0 0.0
    %1964 = vmatprep.subr.mxu0 0.0
    %1965 = vmatpush2.msra.mxu0 0.0
    %1966 = vmatprep.subr.mxu0 0.0
    %1967 = vmatpush2.msra.mxu0 0.0
    %1968 = vmatprep.subr.mxu0 0.0
    %1969 = vmatpush2.msra.mxu0 0.0
    %1970 = vmatprep.subr.mxu0 0.0
    %1971 = vmatpush2.msra.mxu0 0.0
    %1972 = vmatprep.subr.mxu0 0.0
    %1973 = vmatpush2.msra.mxu0 0.0
    %1974 = vmatprep.subr.mxu0 0.0
    %1975 = vmatpush2.msra.mxu0 0.0
    %1976 = vmatprep.subr.mxu0 0.0
    %1977 = vmatpush2.msra.mxu0 0.0
    %1978 = vmatprep.subr.mxu0 0.0
    %1979 = vmatpush2.msra.mxu0 0.0
    %1980 = vmatprep.subr.mxu0 0.0
    %1981 = vmatpush2.msra.mxu0 0.0
    %1982 = vmatprep.subr.mxu0 0.0
    %1983 = vmatpush2.msra.mxu0 0.0
    %1984 = vmatprep.subr.mxu0 0.0
    %1985 = vmatpush2.msra.mxu0 0.0
    %1986 = vmatprep.subr.mxu0 0.0
    %1987 = vmatpush2.msra.mxu0 0.0
    %1988 = vmatprep.subr.mxu0 0.0
    %1989 = vmatpush2.msra.mxu0 0.0
    %1990 = vmatprep.subr.mxu0 0.0
    %1991 = vmatpush2.msra.mxu0 0.0
    %1992 = vmatprep.subr.mxu0 0.0
    %1993 = vmatpush2.msra.mxu0 0.0
    %1994 = vmatprep.mubr.f32.mxu0 0.0
    %v1995 = vand.u32 %v1540, 4294901760
    %1996 = vmatmul.mubr.f32.gmra.mxu0 %v1995
    %v1997 = vpop.f32.mrf.mxu0
    %v1998 = vadd.f32 %v1925, %v1997
    %v1999 = vpop.f32.mrf.mxu0
    %2000 = vdwg.mxu0
    %v2001 = vadd.f32 %v1998, %v1047
    %2003 = vrot.lane.b32.xlu0 %v2001, 32
    %v2004 = vpop.permute.xlu0 %2003
    %v2006 = vrcp.pop %v2004
    %v2007 = vmul.f32 %v577, %v2006
    %2008 = vrot.lane.b32.xlu0 %v1528, 16
    %v2009 = vpop.permute.xlu0 %2008
    %v2011 = vmul.f32 %v2007, %v2009
    %2013 = vrot.lane.b32.xlu0 %v2011, 96
    %v2014 = vpop.permute.xlu0 %2013
    %2016 = vst.msk [vmem:[#allocation12] sm:$0xff] %vm584, %v2014
    // Predicated region
    $region42: #{tpu_custom_call.1} parent=1 // pred_check
      _
    $region43: #{tpu_custom_call.1} parent=1 // pred_check_branch
      %2018 = sbr.rel (0) target = $region45
    $region44: #{tpu_custom_call.1} parent=1 // pred_region
      %s2020 = ssub.s32 128, 128
      %2021 = vsyncadd [#allocation4], %s2020
      %s2023 = sshll.u32 [#allocation12], 4
      %s2024 = int_to_ptr.vmem [resolvable:$true] %s2023
      %2026 = dma.vmem_to_hbm [thread:$0]  %s2024, 128, %s5, [#allocation4]
    $region45: #{tpu_custom_call.1} parent=1 // pred_fallthru
      _
    // Predicated region
    $region46: #{tpu_custom_call.1} parent=1 // pred_check
      _
    $region47: #{tpu_custom_call.1} parent=1 // pred_check_branch
      %2028 = sbr.rel (0) target = $region49
    $region48: #{tpu_custom_call.1} parent=1 // pred_region
      %2029 = dma.done [#allocation4], 128
    $region49: #{tpu_custom_call.1} parent=1 // pred_fallthru
      _
    %2030 = vsyncpa [#allocation3], 1
    %2031 = vsyncpa [#allocation8], 1
    %2032 = vsyncpa [#allocation11], 1
    %2033 = vsyncpa [#allocation4], 1
    %2034 = vsyncpa [#allocation5], 1

</llo_original>
